<compile_context>
chip_gen: v6e
topology: v6e:2x2x1
jax: 0.10.0
libtpu: 0.0.40
codegen_flags: <defaults>
</compile_context>

<pallas_src>
import functools

import jax
import jax.numpy as jnp
from jax.experimental import pallas as pl
from jax.experimental.pallas import tpu as pltpu

LANE_PAD = 128  # pad feature dim to one full vreg lane width


def _round_up(n, m):
    return ((n + m - 1) // m) * m


# ---------------------------------------------------------------------------
# Kernel: entire encoder for one batch tile, layers unrolled statically.
# ---------------------------------------------------------------------------
def _fused_encoder_kernel(x_ref, w_ref, c_ref, a_ref, o_ref, *, fin, fout):
    """o = PReLU( ... PReLU(x @ W'_0 + c_0) ... @ W'_{L-1} + c_{L-1} )[:, :fout]

    x_ref : (TB, fin)       f32   batch tile
    w_ref : (L, 128, 128)   bf16  folded weights, VMEM-resident across the grid
    c_ref : (L, 128)        f32   folded bias + BN shift
    a_ref : (L, 128)        f32   PReLU slope, broadcast across lanes
    o_ref : (TB, fout)      f32
    Activations never leave vregs/VMEM across layers. Padded lanes (cols >=
    layer width) stay exactly zero: padded W rows/cols and c lanes are zero,
    and PReLU(0) = 0, so the final lane-slice is exact.
    """
    n_layers = w_ref.shape[0]
    x = x_ref[...].astype(jnp.bfloat16)                   # MXU operand
    for l in range(n_layers):                             # static unroll
        # First layer contracts over the true input width (K = fin); padded
        # weight rows are zero for all other layers so the full tile is used.
        w = w_ref[0, :fin, :] if l == 0 else w_ref[l]     # bf16
        y = jnp.dot(x, w, preferred_element_type=jnp.float32)   # MXU, f32 acc
        y = y + c_ref[l]                                  # (128,) broadcast, f32
        a = a_ref[l]                                      # (128,) slope, f32
        y = jnp.where(y > 0.0, y, a * y)                  # PReLU on VPU (f32)
        if l + 1 < n_layers:
            x = y.astype(jnp.bfloat16)                    # next MXU operand
        else:
            o_ref[...] = y[:, :fout].astype(o_ref.dtype)  # write valid lanes only


# ---------------------------------------------------------------------------
# Wrapper (jitted): batch-blocked grid, weights resident, no pad/slice ops.
# ---------------------------------------------------------------------------
@functools.partial(jax.jit, static_argnames=("fin", "fout", "block_b"))
def encoder_forward(x, w_stack, c_stack, a_stack, *, fin, fout, block_b=256):
    B = x.shape[0]
    L, pad, _ = w_stack.shape

    # Batch tile: multiple of 8 sublanes, capped at block_b.
    tb = min(block_b, _round_up(B, 8))
    b_pad = _round_up(B, tb)

    xf = x.astype(jnp.float32)
    if b_pad != B:  # ragged batch: pad rows once (sliced off after the call)
        xf = jnp.zeros((b_pad, fin), jnp.float32).at[:B].set(xf)

    grid = (b_pad // tb,)
    flops = 2 * b_pad * pad * pad * L
    bytes_accessed = (b_pad * fin * 4 + b_pad * fout * 4
                      + w_stack.size * 2 + c_stack.size * 4 + a_stack.size * 4)

    out = pl.pallas_call(
        functools.partial(_fused_encoder_kernel, fin=fin, fout=fout),
        out_shape=jax.ShapeDtypeStruct((b_pad, fout), jnp.float32),
        grid=grid,
        in_specs=[
            pl.BlockSpec((tb, fin), lambda i: (i, 0)),          # x tile (blocked on batch)
            pl.BlockSpec((L, pad, pad), lambda i: (0, 0, 0)),   # weights: VMEM-resident
            pl.BlockSpec((L, pad), lambda i: (0, 0)),           # folded bias: resident
            pl.BlockSpec((L, pad), lambda i: (0, 0)),           # PReLU slopes: resident
        ],
        out_specs=pl.BlockSpec((tb, fout), lambda i: (i, 0)),
        compiler_params=pltpu.CompilerParams(
            dimension_semantics=("parallel",),  # shard batch blocks across TCs (v7x)
        ),
        cost_estimate=pl.CostEstimate(
            flops=flops, transcendentals=0, bytes_accessed=bytes_accessed),
    )(xf, w_stack, c_stack, a_stack)

    return out[:B] if b_pad != B else out


# ---------------------------------------------------------------------------
# Parameter construction (matches the PyTorch module's try/except layering).
# ---------------------------------------------------------------------------
def build_layer_specs(layer_list):
    """(fin, fout) per fused unit, reproducing the try/except construction."""
    specs = []
    n = len(layer_list)
    for i in range(n):
        specs.append((layer_list[i], layer_list[i]))          # Linear(h[i], h[i])
        if i + 1 < n:
            specs.append((layer_list[i], layer_list[i + 1]))  # Linear(h[i], h[i+1])
        # else: IndexError inside the try -> except: continue (layer dropped)
    return specs


def init_encoder_params(key, layer_list):
    """Deterministic synthetic parameters (shapes match the PyTorch module)."""
    params = []
    for idx, (fin, fout) in enumerate(build_layer_specs(layer_list)):
        k = jax.random.fold_in(key, idx)
        kw, kb, kg, kbe, km, kv = jax.random.split(k, 6)
        bound = 1.0 / jnp.sqrt(jnp.float32(fin))
        W = jax.random.uniform(kw, (fout, fin), jnp.float32, -bound, bound)
        b = jax.random.uniform(kb, (fout,), jnp.float32, -bound, bound)
        gamma = 1.0 + 0.1 * jax.random.normal(kg, (fout,), jnp.float32)    # BN weight
        beta = 0.1 * jax.random.normal(kbe, (fout,), jnp.float32)          # BN bias
        r_mean = 0.1 * jax.random.normal(km, (fout,), jnp.float32)         # running mean
        r_var = 1.0 + 0.1 * jax.random.uniform(kv, (fout,), jnp.float32)   # running var
        a = jnp.array([0.25], dtype=jnp.float32)                           # nn.PReLU default
        params.append(dict(W=W, b=b, gamma=gamma, beta=beta,
                           mean=r_mean, var=r_var, a=a))
    return params


def fold_and_pad_params(params, pad=LANE_PAD, eps=1e-5):
    """Pre-fold BN (eval) + bias into weights, zero-pad to (pad, pad), cast bf16.

    Done ONCE, outside the per-forward path.
      W'_l = W_l^T * s_l   (s = gamma / sqrt(var + eps))   -> bf16 MXU operand
      c_l  = b_l * s_l + (beta - mean * s_l)               -> f32
    Padded-lane invariant: all entries beyond (fin, fout) are exactly zero
    (bf16 preserves 0), and PReLU(0) = 0, so padded lanes stay zero end-to-end.
    """
    w_list, c_list, a_list = [], [], []
    for p in params:
        s = p["gamma"] / jnp.sqrt(p["var"] + eps)
        t = p["beta"] - p["mean"] * s
        w_fold = jnp.transpose(p["W"]) * s[None, :]          # (fin, fout) f32
        c_fold = p["b"] * s + t                              # (fout,)
        fin, fout = w_fold.shape
        assert fin <= pad and fout <= pad, (fin, fout, pad)
        w_list.append(jnp.zeros((pad, pad), jnp.float32).at[:fin, :fout].set(w_fold))
        c_list.append(jnp.zeros((pad,), jnp.float32).at[:fout].set(c_fold))
        a_list.append(jnp.full((pad,), p["a"][0], jnp.float32))
    w_stack = jnp.stack(w_list).astype(jnp.bfloat16)         # (L, 128, 128) bf16
    c_stack = jnp.stack(c_list)                              # (L, 128)      f32
    a_stack = jnp.stack(a_list)                              # (L, 128)      f32
    return w_stack, c_stack, a_stack


# ---------------------------------------------------------------------------
# Pure-JAX reference (unfused, unfolded, f32) for a correctness check.
# ---------------------------------------------------------------------------
def encoder_reference(x, params, eps=1e-5):
    for p in params:
        y = x @ p["W"].T + p["b"]
        s = p["gamma"] / jnp.sqrt(p["var"] + eps)
        t = p["beta"] - p["mean"] * s
        y = y * s + t
        x = jnp.where(y > 0.0, y, p["a"][0] * y)
    return x


if __name__ == "__main__":
    args = {
        "encoder_normal": "batch",
        "encoder_layer_list": [32, 64, 32],
        "drop_out": 0.1,
    }
    key = jax.random.PRNGKey(0)
    kx, kp = jax.random.split(key)

    layer_list = args["encoder_layer_list"]
    batch = 512  # exercises the batch grid: two (256, 32) tiles
    x = jax.random.normal(kx, (batch, layer_list[0]), jnp.float32)

    params = init_encoder_params(kp, layer_list)
    w_stack, c_stack, a_stack = fold_and_pad_params(params)   # hoisted prep

    fin, fout = layer_list[0], layer_list[-1]
    # TODO(synk): Dropout is identity and BatchNorm uses running stats
    # (inference semantics); training-mode batch statistics are not implemented.
    out = encoder_forward(x, w_stack, c_stack, a_stack, fin=fin, fout=fout)
    out = jax.block_until_ready(out)

    assert out.shape == (batch, fout), out.shape
    assert bool(jnp.all(jnp.isfinite(out)))

    # Tolerance vs the unfused f32 reference (bf16 MXU operands + BN folding
    # reorder reduce f32 fidelity; fine for inference).
    ref = encoder_reference(x, params)
    err = float(jnp.max(jnp.abs(out - ref)))
    scale = float(jnp.max(jnp.abs(ref))) + 1e-6
    assert err <= 0.05 * scale, (err, scale)

    print("KERNEL_OK")
</pallas_src>

<mosaic_0001>
module attributes {stable_mosaic.version = 11 : i64} {
  func.func @_fused_encoder_kernel(%arg0: i32, %arg1: memref<256x32xf32, #tpu.memory_space<vmem>>, %arg2: memref<5x128x128xbf16, #tpu.memory_space<vmem>>, %arg3: memref<5x128xf32, #tpu.memory_space<vmem>>, %arg4: memref<5x128xf32, #tpu.memory_space<vmem>>, %arg5: memref<256x32xf32, #tpu.memory_space<vmem>>) attributes {dimension_semantics = [#tpu.dimension_semantics<parallel>], iteration_bounds = array<i64: 2>, scalar_prefetch = 0 : i64, scratch_operands = 0 : i64, tpu.core_type = #tpu.core_type<tc>, window_params = [{transform_indices = @transform_0, window_bounds = array<i64: 256, 32>}, {pipeline_mode = #tpu.pipeline_mode<synchronous>, transform_indices = @transform_1, window_bounds = array<i64: 5, 128, 128>}, {pipeline_mode = #tpu.pipeline_mode<synchronous>, transform_indices = @transform_2, window_bounds = array<i64: 5, 128>}, {pipeline_mode = #tpu.pipeline_mode<synchronous>, transform_indices = @transform_3, window_bounds = array<i64: 5, 128>}, {transform_indices = @transform_4, window_bounds = array<i64: 256, 32>}]} {
    %c0 = arith.constant 0 : index
    %c0_0 = arith.constant 0 : index
    %0 = vector.load %arg1[%c0, %c0_0] : memref<256x32xf32, #tpu.memory_space<vmem>>, vector<256x32xf32>
    %1 = arith.truncf %0 : vector<256x32xf32> to vector<256x32xbf16>
    %c0_1 = arith.constant 0 : index
    %c0_2 = arith.constant 0 : index
    %c0_3 = arith.constant 0 : index
    %2 = vector.load %arg2[%c0_1, %c0_2, %c0_3] : memref<5x128x128xbf16, #tpu.memory_space<vmem>>, vector<1x32x128xbf16>
    %3 = vector.shape_cast %2 : vector<1x32x128xbf16> to vector<32x128xbf16>
    %cst = arith.constant dense<0.000000e+00> : vector<256x128xf32>
    %4 = tpu.matmul %1, %3, %cst {dimension_numbers = #tpu.dot_dimension_numbers<[1], [0], [0], [1], [0, 0, 1, 1], [], []>} : vector<256x32xbf16>, vector<32x128xbf16>, vector<256x128xf32> -> vector<256x128xf32>
    %c0_4 = arith.constant 0 : index
    %c0_5 = arith.constant 0 : index
    %5 = vector.load %arg3[%c0_4, %c0_5] : memref<5x128xf32, #tpu.memory_space<vmem>>, vector<1x128xf32>
    %6 = vector.shape_cast %5 : vector<1x128xf32> to vector<128xf32>
    %7 = vector.shape_cast %6 : vector<128xf32> to vector<1x128xf32>
    %8 = vector.broadcast %7 : vector<1x128xf32> to vector<256x128xf32>
    %9 = arith.addf %4, %8 : vector<256x128xf32>
    %c0_6 = arith.constant 0 : index
    %c0_7 = arith.constant 0 : index
    %10 = vector.load %arg4[%c0_6, %c0_7] : memref<5x128xf32, #tpu.memory_space<vmem>>, vector<1x128xf32>
    %11 = vector.shape_cast %10 : vector<1x128xf32> to vector<128xf32>
    %cst_8 = arith.constant 0.000000e+00 : f32
    %12 = vector.broadcast %cst_8 : f32 to vector<256x128xf32>
    %13 = arith.cmpf ogt, %9, %12 : vector<256x128xf32>
    %14 = vector.shape_cast %11 : vector<128xf32> to vector<1x128xf32>
    %15 = vector.broadcast %14 : vector<1x128xf32> to vector<256x128xf32>
    %16 = arith.mulf %15, %9 : vector<256x128xf32>
    %17 = arith.select %13, %9, %16 : vector<256x128xi1>, vector<256x128xf32>
    %18 = arith.truncf %17 : vector<256x128xf32> to vector<256x128xbf16>
    %c1 = arith.constant 1 : index
    %c0_9 = arith.constant 0 : index
    %c0_10 = arith.constant 0 : index
    %19 = vector.load %arg2[%c1, %c0_9, %c0_10] : memref<5x128x128xbf16, #tpu.memory_space<vmem>>, vector<1x128x128xbf16>
    %20 = vector.shape_cast %19 : vector<1x128x128xbf16> to vector<128x128xbf16>
    %cst_11 = arith.constant dense<0.000000e+00> : vector<256x128xf32>
    %21 = tpu.matmul %18, %20, %cst_11 {dimension_numbers = #tpu.dot_dimension_numbers<[1], [0], [0], [1], [0, 0, 1, 1], [], []>} : vector<256x128xbf16>, vector<128x128xbf16>, vector<256x128xf32> -> vector<256x128xf32>
    %c1_12 = arith.constant 1 : index
    %c0_13 = arith.constant 0 : index
    %22 = vector.load %arg3[%c1_12, %c0_13] : memref<5x128xf32, #tpu.memory_space<vmem>>, vector<1x128xf32>
    %23 = vector.shape_cast %22 : vector<1x128xf32> to vector<128xf32>
    %24 = vector.shape_cast %23 : vector<128xf32> to vector<1x128xf32>
    %25 = vector.broadcast %24 : vector<1x128xf32> to vector<256x128xf32>
    %26 = arith.addf %21, %25 : vector<256x128xf32>
    %c1_14 = arith.constant 1 : index
    %c0_15 = arith.constant 0 : index
    %27 = vector.load %arg4[%c1_14, %c0_15] : memref<5x128xf32, #tpu.memory_space<vmem>>, vector<1x128xf32>
    %28 = vector.shape_cast %27 : vector<1x128xf32> to vector<128xf32>
    %cst_16 = arith.constant 0.000000e+00 : f32
    %29 = vector.broadcast %cst_16 : f32 to vector<256x128xf32>
    %30 = arith.cmpf ogt, %26, %29 : vector<256x128xf32>
    %31 = vector.shape_cast %28 : vector<128xf32> to vector<1x128xf32>
    %32 = vector.broadcast %31 : vector<1x128xf32> to vector<256x128xf32>
    %33 = arith.mulf %32, %26 : vector<256x128xf32>
    %34 = arith.select %30, %26, %33 : vector<256x128xi1>, vector<256x128xf32>
    %35 = arith.truncf %34 : vector<256x128xf32> to vector<256x128xbf16>
    %c2 = arith.constant 2 : index
    %c0_17 = arith.constant 0 : index
    %c0_18 = arith.constant 0 : index
    %36 = vector.load %arg2[%c2, %c0_17, %c0_18] : memref<5x128x128xbf16, #tpu.memory_space<vmem>>, vector<1x128x128xbf16>
    %37 = vector.shape_cast %36 : vector<1x128x128xbf16> to vector<128x128xbf16>
    %cst_19 = arith.constant dense<0.000000e+00> : vector<256x128xf32>
    %38 = tpu.matmul %35, %37, %cst_19 {dimension_numbers = #tpu.dot_dimension_numbers<[1], [0], [0], [1], [0, 0, 1, 1], [], []>} : vector<256x128xbf16>, vector<128x128xbf16>, vector<256x128xf32> -> vector<256x128xf32>
    %c2_20 = arith.constant 2 : index
    %c0_21 = arith.constant 0 : index
    %39 = vector.load %arg3[%c2_20, %c0_21] : memref<5x128xf32, #tpu.memory_space<vmem>>, vector<1x128xf32>
    %40 = vector.shape_cast %39 : vector<1x128xf32> to vector<128xf32>
    %41 = vector.shape_cast %40 : vector<128xf32> to vector<1x128xf32>
    %42 = vector.broadcast %41 : vector<1x128xf32> to vector<256x128xf32>
    %43 = arith.addf %38, %42 : vector<256x128xf32>
    %c2_22 = arith.constant 2 : index
    %c0_23 = arith.constant 0 : index
    %44 = vector.load %arg4[%c2_22, %c0_23] : memref<5x128xf32, #tpu.memory_space<vmem>>, vector<1x128xf32>
    %45 = vector.shape_cast %44 : vector<1x128xf32> to vector<128xf32>
    %cst_24 = arith.constant 0.000000e+00 : f32
    %46 = vector.broadcast %cst_24 : f32 to vector<256x128xf32>
    %47 = arith.cmpf ogt, %43, %46 : vector<256x128xf32>
    %48 = vector.shape_cast %45 : vector<128xf32> to vector<1x128xf32>
    %49 = vector.broadcast %48 : vector<1x128xf32> to vector<256x128xf32>
    %50 = arith.mulf %49, %43 : vector<256x128xf32>
    %51 = arith.select %47, %43, %50 : vector<256x128xi1>, vector<256x128xf32>
    %52 = arith.truncf %51 : vector<256x128xf32> to vector<256x128xbf16>
    %c3 = arith.constant 3 : index
    %c0_25 = arith.constant 0 : index
    %c0_26 = arith.constant 0 : index
    %53 = vector.load %arg2[%c3, %c0_25, %c0_26] : memref<5x128x128xbf16, #tpu.memory_space<vmem>>, vector<1x128x128xbf16>
    %54 = vector.shape_cast %53 : vector<1x128x128xbf16> to vector<128x128xbf16>
    %cst_27 = arith.constant dense<0.000000e+00> : vector<256x128xf32>
    %55 = tpu.matmul %52, %54, %cst_27 {dimension_numbers = #tpu.dot_dimension_numbers<[1], [0], [0], [1], [0, 0, 1, 1], [], []>} : vector<256x128xbf16>, vector<128x128xbf16>, vector<256x128xf32> -> vector<256x128xf32>
    %c3_28 = arith.constant 3 : index
    %c0_29 = arith.constant 0 : index
    %56 = vector.load %arg3[%c3_28, %c0_29] : memref<5x128xf32, #tpu.memory_space<vmem>>, vector<1x128xf32>
    %57 = vector.shape_cast %56 : vector<1x128xf32> to vector<128xf32>
    %58 = vector.shape_cast %57 : vector<128xf32> to vector<1x128xf32>
    %59 = vector.broadcast %58 : vector<1x128xf32> to vector<256x128xf32>
    %60 = arith.addf %55, %59 : vector<256x128xf32>
    %c3_30 = arith.constant 3 : index
    %c0_31 = arith.constant 0 : index
    %61 = vector.load %arg4[%c3_30, %c0_31] : memref<5x128xf32, #tpu.memory_space<vmem>>, vector<1x128xf32>
    %62 = vector.shape_cast %61 : vector<1x128xf32> to vector<128xf32>
    %cst_32 = arith.constant 0.000000e+00 : f32
    %63 = vector.broadcast %cst_32 : f32 to vector<256x128xf32>
    %64 = arith.cmpf ogt, %60, %63 : vector<256x128xf32>
    %65 = vector.shape_cast %62 : vector<128xf32> to vector<1x128xf32>
    %66 = vector.broadcast %65 : vector<1x128xf32> to vector<256x128xf32>
    %67 = arith.mulf %66, %60 : vector<256x128xf32>
    %68 = arith.select %64, %60, %67 : vector<256x128xi1>, vector<256x128xf32>
    %69 = arith.truncf %68 : vector<256x128xf32> to vector<256x128xbf16>
    %c4 = arith.constant 4 : index
    %c0_33 = arith.constant 0 : index
    %c0_34 = arith.constant 0 : index
    %70 = vector.load %arg2[%c4, %c0_33, %c0_34] : memref<5x128x128xbf16, #tpu.memory_space<vmem>>, vector<1x128x128xbf16>
    %71 = vector.shape_cast %70 : vector<1x128x128xbf16> to vector<128x128xbf16>
    %cst_35 = arith.constant dense<0.000000e+00> : vector<256x128xf32>
    %72 = tpu.matmul %69, %71, %cst_35 {dimension_numbers = #tpu.dot_dimension_numbers<[1], [0], [0], [1], [0, 0, 1, 1], [], []>} : vector<256x128xbf16>, vector<128x128xbf16>, vector<256x128xf32> -> vector<256x128xf32>
    %c4_36 = arith.constant 4 : index
    %c0_37 = arith.constant 0 : index
    %73 = vector.load %arg3[%c4_36, %c0_37] : memref<5x128xf32, #tpu.memory_space<vmem>>, vector<1x128xf32>
    %74 = vector.shape_cast %73 : vector<1x128xf32> to vector<128xf32>
    %75 = vector.shape_cast %74 : vector<128xf32> to vector<1x128xf32>
    %76 = vector.broadcast %75 : vector<1x128xf32> to vector<256x128xf32>
    %77 = arith.addf %72, %76 : vector<256x128xf32>
    %c4_38 = arith.constant 4 : index
    %c0_39 = arith.constant 0 : index
    %78 = vector.load %arg4[%c4_38, %c0_39] : memref<5x128xf32, #tpu.memory_space<vmem>>, vector<1x128xf32>
    %79 = vector.shape_cast %78 : vector<1x128xf32> to vector<128xf32>
    %cst_40 = arith.constant 0.000000e+00 : f32
    %80 = vector.broadcast %cst_40 : f32 to vector<256x128xf32>
    %81 = arith.cmpf ogt, %77, %80 : vector<256x128xf32>
    %82 = vector.shape_cast %79 : vector<128xf32> to vector<1x128xf32>
    %83 = vector.broadcast %82 : vector<1x128xf32> to vector<256x128xf32>
    %84 = arith.mulf %83, %77 : vector<256x128xf32>
    %85 = arith.select %81, %77, %84 : vector<256x128xi1>, vector<256x128xf32>
    %86 = vector.extract_strided_slice %85 {offsets = [0, 0], sizes = [256, 32], strides = [1, 1]} : vector<256x128xf32> to vector<256x32xf32>
    %c0_41 = arith.constant 0 : index
    %c0_42 = arith.constant 0 : index
    %87 = vector.load %arg5[%c0_41, %c0_42] : memref<256x32xf32, #tpu.memory_space<vmem>>, vector<256x32xf32>
    tpu.vector_store %arg5[%c0_41, %c0_42], %86 {strides = array<i32>} : memref<256x32xf32, #tpu.memory_space<vmem>>, vector<256x32xf32>,
    return
  }
  func.func @transform_0(%arg0: i32) -> (i32, i32) {
    %c0_i32 = arith.constant 0 : i32
    %c0_i32_0 = arith.constant 0 : i32
    return %arg0, %c0_i32 : i32, i32
  }
  func.func @transform_1(%arg0: i32) -> (i32, i32, i32) {
    %c0_i32 = arith.constant 0 : i32
    %c0_i32_0 = arith.constant 0 : i32
    %c0_i32_1 = arith.constant 0 : i32
    %c0_i32_2 = arith.constant 0 : i32
    return %c0_i32, %c0_i32_0, %c0_i32_1 : i32, i32, i32
  }
  func.func @transform_2(%arg0: i32) -> (i32, i32) {
    %c0_i32 = arith.constant 0 : i32
    %c0_i32_0 = arith.constant 0 : i32
    %c0_i32_1 = arith.constant 0 : i32
    return %c0_i32, %c0_i32_0 : i32, i32
  }
  func.func @transform_3(%arg0: i32) -> (i32, i32) {
    %c0_i32 = arith.constant 0 : i32
    %c0_i32_0 = arith.constant 0 : i32
    %c0_i32_1 = arith.constant 0 : i32
    return %c0_i32, %c0_i32_0 : i32, i32
  }
  func.func @transform_4(%arg0: i32) -> (i32, i32) {
    %c0_i32 = arith.constant 0 : i32
    %c0_i32_0 = arith.constant 0 : i32
    return %arg0, %c0_i32 : i32, i32
  }
}

</mosaic_0001>

<llo_original>
// kernel: encoder_forward.1
$region0: #{encoder_forward.1}
  #allocation0 [shape = 'u32[]', space=smem, size = 0x4, offset = 0x4, fixed_abs, tag = 'smem constant byte address 0x4 - core index']
  #allocation1 [shape = 'u32[144,128]{1,0:T(1,128)}', space=vmem, size = 0x12000, scoped, tag = 'internal scratch']
  %s0 = inlined_call_operand.vmem [shape: f32[512,32], index: 0, kind: input, shape index: {}]
  %s1 = inlined_call_operand.vmem [shape: bf16[5,128,128], index: 1, kind: input, shape index: {}]
  %s2 = inlined_call_operand.vmem [shape: f32[5,128], index: 2, kind: input, shape index: {}]
  %s3 = inlined_call_operand.vmem [shape: f32[5,128], index: 3, kind: input, shape index: {}]
  %s4 = inlined_call_operand.vmem [shape: f32[512,32], index: 4, kind: output, shape index: {}]
  %s5 = sld [smem:[#allocation0]]
  $region49: #{encoder_forward.1} parent=0
    _
  %s7 = ssub.s32 1, %s5
  %s8 = scalar_select 0, %s7, %s5
  loop: start=0, step=1, limit=4
  $region2: #{encoder_forward.1} parent=0 // loop_pre_header
    _
  $region3: #{encoder_forward.1} parent=0 // loop_header
    %s10 = sphi 0, %s14
    %p11 = scmp.ge.s32.totalorder %s10, 4
    %s20 = sphi 0, %s22
    %s23 = sphi 0, %s20
    %s24 = sphi 0, %s23
    %s40 = sphi 0, %s24
    %s44 = sphi 0, %s44
    %s46 = sphi 0, %s44
    %s47 = sphi 0, %s46
    %s61 = sphi 0, %s47
    %s65 = sphi 0, %s65
    %s67 = sphi 0, %s65
    %s68 = sphi 0, %s67
    %s82 = sphi 0, %s68
    %s86 = sphi 0, %s86
    %s88 = sphi 0, %s86
    %s89 = sphi 0, %s88
    %s103 = sphi 0, %s89
    %s109 = sphi 0, %s111
    %s112 = sphi 0, %s109
    %s113 = sphi 0, %s112
    %s129 = sphi 0, %s113
  $region4: #{encoder_forward.1} parent=0 // loop_header_branch
    %13 = sbr.rel (%p11) target = $region8
  $region5: #{encoder_forward.1} parent=0 // loop_body
    %s15 = ssub.s32 %s10, 1
    %s16 = ssub.s32 %s10, 2
    %s17 = sadd.s32 %s10, 1
    %s18 = ssub.s32 %s10, %s17
    %p19 = scmp.eq.s32.totalorder %s18, 0
    %s21 = sadd.s32 %s20, 1
    %s22 = scalar_select %p19, %s20, %s21
    %p25 = pneg %p19
    %p26 = scmp.eq.s32.totalorder %s10, 1
    %p27 = por %p25, %p26
    %p28 = scmp.ne.s32.totalorder %s20, %s23
    %p29 = scmp.eq.s32.totalorder %s10, 0
    %p30 = por %p28, %p29
    %p31 = scmp.ne.s32.totalorder %s20, %s23
    %p32 = scmp.eq.s32.totalorder %s15, 1
    %p33 = por %p31, %p32
    %p34 = scmp.ne.s32.totalorder %s23, %s24
    %p35 = scmp.eq.s32.totalorder %s15, 0
    %p36 = por %p34, %p35
    %p37 = scmp.ne.s32.totalorder %s23, %s24
    %p38 = scmp.eq.s32.totalorder %s16, 1
    %p39 = por %p37, %p38
    %p41 = scmp.ne.s32.totalorder %s24, %s40
    %p42 = scmp.eq.s32.totalorder %s16, 0
    %p43 = por %p41, %p42
    %s45 = sadd.s32 %s44, 1
    %p48 = scmp.eq.s32.totalorder %s10, 1
    %p49 = scmp.ne.s32.totalorder %s44, %s46
    %p50 = scmp.eq.s32.totalorder %s10, 0
    %p51 = por %p49, %p50
    %p52 = scmp.ne.s32.totalorder %s44, %s46
    %p53 = scmp.eq.s32.totalorder %s15, 1
    %p54 = por %p52, %p53
    %p55 = scmp.ne.s32.totalorder %s46, %s47
    %p56 = scmp.eq.s32.totalorder %s15, 0
    %p57 = por %p55, %p56
    %p58 = scmp.ne.s32.totalorder %s46, %s47
    %p59 = scmp.eq.s32.totalorder %s16, 1
    %p60 = por %p58, %p59
    %p62 = scmp.ne.s32.totalorder %s47, %s61
    %p63 = scmp.eq.s32.totalorder %s16, 0
    %p64 = por %p62, %p63
    %s66 = sadd.s32 %s65, 1
    %p69 = scmp.eq.s32.totalorder %s10, 1
    %p70 = scmp.ne.s32.totalorder %s65, %s67
    %p71 = scmp.eq.s32.totalorder %s10, 0
    %p72 = por %p70, %p71
    %p73 = scmp.ne.s32.totalorder %s65, %s67
    %p74 = scmp.eq.s32.totalorder %s15, 1
    %p75 = por %p73, %p74
    %p76 = scmp.ne.s32.totalorder %s67, %s68
    %p77 = scmp.eq.s32.totalorder %s15, 0
    %p78 = por %p76, %p77
    %p79 = scmp.ne.s32.totalorder %s67, %s68
    %p80 = scmp.eq.s32.totalorder %s16, 1
    %p81 = por %p79, %p80
    %p83 = scmp.ne.s32.totalorder %s68, %s82
    %p84 = scmp.eq.s32.totalorder %s16, 0
    %p85 = por %p83, %p84
    %s87 = sadd.s32 %s86, 1
    %p90 = scmp.eq.s32.totalorder %s10, 1
    %p91 = scmp.ne.s32.totalorder %s86, %s88
    %p92 = scmp.eq.s32.totalorder %s10, 0
    %p93 = por %p91, %p92
    %p94 = scmp.ne.s32.totalorder %s86, %s88
    %p95 = scmp.eq.s32.totalorder %s15, 1
    %p96 = por %p94, %p95
    %p97 = scmp.ne.s32.totalorder %s88, %s89
    %p98 = scmp.eq.s32.totalorder %s15, 0
    %p99 = por %p97, %p98
    %p100 = scmp.ne.s32.totalorder %s88, %s89
    %p101 = scmp.eq.s32.totalorder %s16, 1
    %p102 = por %p100, %p101
    %p104 = scmp.ne.s32.totalorder %s89, %s103
    %p105 = scmp.eq.s32.totalorder %s16, 0
    %p106 = por %p104, %p105
    %s107 = ssub.s32 %s10, %s17
    %p108 = scmp.eq.s32.totalorder %s107, 0
    %s110 = sadd.s32 %s109, 1
    %s111 = scalar_select %p108, %s109, %s110
    %p114 = pneg %p108
    %p115 = scmp.eq.s32.totalorder %s10, 1
    %p116 = por %p114, %p115
    %p117 = scmp.ne.s32.totalorder %s109, %s112
    %p118 = scmp.eq.s32.totalorder %s10, 0
    %p119 = por %p117, %p118
    %p120 = scmp.ne.s32.totalorder %s109, %s112
    %p121 = scmp.eq.s32.totalorder %s15, 1
    %p122 = por %p120, %p121
    %p123 = scmp.ne.s32.totalorder %s112, %s113
    %p124 = scmp.eq.s32.totalorder %s15, 0
    %p125 = por %p123, %p124
    %p126 = scmp.ne.s32.totalorder %s112, %s113
    %p127 = scmp.eq.s32.totalorder %s16, 1
    %p128 = por %p126, %p127
    %p130 = scmp.ne.s32.totalorder %s113, %s129
    %p131 = scmp.eq.s32.totalorder %s16, 0
    %p132 = por %p130, %p131
    %p133 = scmp.le.s32.totalorder 1, %s10
    %p134 = scmp.lt.s32.totalorder %s10, 3
    %p135 = pnand %p133, %p134
    %p136 = pneg %p135
    // Predicated region
    $region9: #{encoder_forward.1} parent=5 // pred_check
      _
    $region10: #{encoder_forward.1} parent=5 // pred_check_branch
      %138 = sbr.rel (%p135) target = $region12
    $region11: #{encoder_forward.1} parent=5 // pred_region
      %s139 = ssub.s32 %s10, 1
      // Predicated region
      $region13: #{encoder_forward.1} parent=11 // pred_check
        %p140 = pneg %p57
      $region14: #{encoder_forward.1} parent=11 // pred_check_branch
        %142 = sbr.rel (%p140) target = $region16
      $region15: #{encoder_forward.1} parent=11 // pred_region
        _
      $region16: #{encoder_forward.1} parent=11 // pred_fallthru
        _
      // Predicated region
      $region17: #{encoder_forward.1} parent=11 // pred_check
        %p143 = pneg %p78
      $region18: #{encoder_forward.1} parent=11 // pred_check_branch
        %145 = sbr.rel (%p143) target = $region20
      $region19: #{encoder_forward.1} parent=11 // pred_region
        _
      $region20: #{encoder_forward.1} parent=11 // pred_fallthru
        _
      // Predicated region
      $region21: #{encoder_forward.1} parent=11 // pred_check
        %p146 = pneg %p99
      $region22: #{encoder_forward.1} parent=11 // pred_check_branch
        %148 = sbr.rel (%p146) target = $region24
      $region23: #{encoder_forward.1} parent=11 // pred_region
        _
      $region24: #{encoder_forward.1} parent=11 // pred_fallthru
        _
    $region12: #{encoder_forward.1} parent=5 // pred_fallthru
      _
    %p149 = scmp.lt.s32.totalorder %s10, 2
    // Predicated region
    $region25: #{encoder_forward.1} parent=5 // pred_check
      %p150 = pneg %p149
    $region26: #{encoder_forward.1} parent=5 // pred_check_branch
      %152 = sbr.rel (%p150) target = $region28
    $region27: #{encoder_forward.1} parent=5 // pred_region
      // Predicated region
      $region29: #{encoder_forward.1} parent=27 // pred_check
        %p153 = pneg %p30
      $region30: #{encoder_forward.1} parent=27 // pred_check_branch
        %155 = sbr.rel (%p153) target = $region32
      $region31: #{encoder_forward.1} parent=27 // pred_region
        %s156 = smul.u32 32, %s10
        %p157 = scmp.lt.s32.totalorder %s156, 63
        %s158 = scalar_select %p157, %s156, 63
        %s159 = smul.addr %s158, 8
        %s160 = scalar_lea.vmem %s0, %s159
        %s161 = smul.u32 32, %s10
      $region32: #{encoder_forward.1} parent=27 // pred_fallthru
        _
    $region28: #{encoder_forward.1} parent=5 // pred_fallthru
      _
    %p162 = scmp.le.s32.totalorder 1, %s10
    %p163 = scmp.lt.s32.totalorder %s10, 3
    %p164 = pnand %p162, %p163
    %p165 = pneg %p164
    // Predicated region
    $region33: #{encoder_forward.1} parent=5 // pred_check
      _
    $region34: #{encoder_forward.1} parent=5 // pred_check_branch
      %167 = sbr.rel (%p164) target = $region36
    $region35: #{encoder_forward.1} parent=5 // pred_region
      %s168 = ssub.s32 %s10, 1
      %s169 = smul.u32 32, %s15
      %p170 = scmp.lt.s32.totalorder %s169, 63
      %s171 = scalar_select %p170, %s169, 63
      %s172 = smul.addr %s171, 8
      %s173 = scalar_lea.vmem %s0, %s172
      %p174 = pneg %p36
      %p175 = pneg %p33
      %p176 = pneg %p57
      %p177 = pneg %p54
      %p178 = pneg %p78
      %p179 = pneg %p75
      %p180 = pneg %p99
      %p181 = pneg %p96
      %p182 = pneg %p125
      %p183 = pneg %p122
      %s184 = smul.u32 32, %s15
      %p185 = scmp.lt.s32.totalorder %s184, 63
      %s186 = scalar_select %p185, %s184, 63
      %s187 = smul.addr %s186, 8
      %s188 = scalar_lea.vmem %s4, %s187
      %s189 = smul.u32 32, %s15
      %p190 = scmp.lt.s32.totalorder %s189, 63
      %s191 = scalar_select %p190, %s189, 63
      %s192 = smul.addr %s191, 8
      %s193 = scalar_lea.vmem %s0, %s192
      %s194 = smul.u32 32, %s15
      %s195 = smul.u32 32, %s15
      %p196 = scmp.lt.s32.totalorder %s195, 63
      %s197 = scalar_select %p196, %s195, 63
      %s198 = smul.addr %s197, 8
      %s199 = scalar_lea.vmem %s4, %s198
      %s200 = smul.u32 32, %s15
      %v202 = vld [vmem:[%s193] sm:$0xff]
      %v203 = vld [vmem:[%s193 + $0x8] sm:$0xff]
      %v204 = vld [vmem:[%s193 + $0x10] sm:$0xff]
      %v205 = vld [vmem:[%s193 + $0x18] sm:$0xff]
      %v206 = vld [vmem:[%s193 + $0x20] sm:$0xff]
      %v207 = vld [vmem:[%s193 + $0x28] sm:$0xff]
      %v208 = vld [vmem:[%s193 + $0x30] sm:$0xff]
      %v209 = vld [vmem:[%s193 + $0x38] sm:$0xff]
      %v210 = vld [vmem:[%s193 + $0x40] sm:$0xff]
      %v211 = vld [vmem:[%s193 + $0x48] sm:$0xff]
      %v212 = vld [vmem:[%s193 + $0x50] sm:$0xff]
      %v213 = vld [vmem:[%s193 + $0x58] sm:$0xff]
      %v214 = vld [vmem:[%s193 + $0x60] sm:$0xff]
      %v215 = vld [vmem:[%s193 + $0x68] sm:$0xff]
      %v216 = vld [vmem:[%s193 + $0x70] sm:$0xff]
      %v217 = vld [vmem:[%s193 + $0x78] sm:$0xff]
      %v218 = vld [vmem:[%s193 + $0x80] sm:$0xff]
      %v219 = vld [vmem:[%s193 + $0x88] sm:$0xff]
      %v220 = vld [vmem:[%s193 + $0x90] sm:$0xff]
      %v221 = vld [vmem:[%s193 + $0x98] sm:$0xff]
      %v222 = vld [vmem:[%s193 + $0xa0] sm:$0xff]
      %v223 = vld [vmem:[%s193 + $0xa8] sm:$0xff]
      %v224 = vld [vmem:[%s193 + $0xb0] sm:$0xff]
      %v225 = vld [vmem:[%s193 + $0xb8] sm:$0xff]
      %v226 = vld [vmem:[%s193 + $0xc0] sm:$0xff]
      %v227 = vld [vmem:[%s193 + $0xc8] sm:$0xff]
      %v228 = vld [vmem:[%s193 + $0xd0] sm:$0xff]
      %v229 = vld [vmem:[%s193 + $0xd8] sm:$0xff]
      %v230 = vld [vmem:[%s193 + $0xe0] sm:$0xff]
      %v231 = vld [vmem:[%s193 + $0xe8] sm:$0xff]
      %v232 = vld [vmem:[%s193 + $0xf0] sm:$0xff]
      %v233 = vld [vmem:[%s193 + $0xf8] sm:$0xff]
      %v234 = vpack.c.bf16 %v203, %v202
      %v235 = vpack.c.bf16 %v205, %v204
      %v236 = vpack.c.bf16 %v207, %v206
      %v237 = vpack.c.bf16 %v209, %v208
      %v238 = vpack.c.bf16 %v211, %v210
      %v239 = vpack.c.bf16 %v213, %v212
      %v240 = vpack.c.bf16 %v215, %v214
      %v241 = vpack.c.bf16 %v217, %v216
      %v242 = vpack.c.bf16 %v219, %v218
      %v243 = vpack.c.bf16 %v221, %v220
      %v244 = vpack.c.bf16 %v223, %v222
      %v245 = vpack.c.bf16 %v225, %v224
      %v246 = vpack.c.bf16 %v227, %v226
      %v247 = vpack.c.bf16 %v229, %v228
      %v248 = vpack.c.bf16 %v231, %v230
      %v249 = vpack.c.bf16 %v233, %v232
      %v250 = vld [vmem:[%s1] sm:$0xf]
      %v251 = vld [vmem:[%s1 + $0x4] sm:$0xf]
      %v252 = vld [vmem:[%s1 + $0x8] sm:$0xf]
      %v253 = vld [vmem:[%s1 + $0xc] sm:$0xf]
      %v254 = vld [vmem:[%s2] sm:$0x1]
      %v255 = vlaneseq
      %v256 = vshrl.u32 %v255, 7
      %v257 = vsub.s32 0, %v256
      %v258 = vrot.slane %v254, %v257
      %v263 = vunpack.c.l.b16 %v250
      %v264 = vunpack.c.l.b16 %v251
      %v265 = vunpack.c.l.b16 %v252
      %v266 = vunpack.c.l.b16 %v253
      %v267 = vpack.c.b16 %v264, %v263
      %v268 = vpack.c.b16 %v266, %v265
      %vm271 = vcmask 261120
      %v273 = vsel %vm271, %v234, 0
      %v276 = vsel %vm271, %v235, 0
      %v279 = vsel %vm271, %v236, 0
      %v282 = vsel %vm271, %v237, 0
      %v285 = vsel %vm271, %v238, 0
      %v288 = vsel %vm271, %v239, 0
      %v291 = vsel %vm271, %v240, 0
      %v294 = vsel %vm271, %v241, 0
      %v297 = vsel %vm271, %v242, 0
      %v300 = vsel %vm271, %v243, 0
      %v303 = vsel %vm271, %v244, 0
      %v306 = vsel %vm271, %v245, 0
      %v309 = vsel %vm271, %v246, 0
      %v312 = vsel %vm271, %v247, 0
      %v315 = vsel %vm271, %v248, 0
      %v318 = vsel %vm271, %v249, 0
      %320 = vmatprep.subr.bf16.mxu0 0
      %321 = vmatpush1.bf16.msra.mxu0 0
      %322 = vmatprep.subr.bf16.mxu0 0
      %323 = vmatpush1.bf16.msra.mxu0 0
      %324 = vmatprep.subr.bf16.mxu0 0
      %325 = vmatpush1.bf16.msra.mxu0 0
      %326 = vmatprep.subr.bf16.mxu0 0
      %327 = vmatpush1.bf16.msra.mxu0 0
      %328 = vmatprep.subr.bf16.mxu0 0
      %329 = vmatpush1.bf16.msra.mxu0 0
      %330 = vmatprep.subr.bf16.mxu0 0
      %331 = vmatpush1.bf16.msra.mxu0 0
      %332 = vmatprep.subr.bf16.mxu0 0
      %333 = vmatpush1.bf16.msra.mxu0 %v268
      %334 = vmatprep.subr.bf16.mxu0 0
      %335 = vmatpush1.bf16.msra.mxu0 %v267
      %336 = vmatprep.subr.bf16.mxu0 0
      %337 = vmatpush2.bf16.msra.mxu0 0
      %338 = vmatprep.subr.bf16.mxu0 0
      %339 = vmatpush2.bf16.msra.mxu0 0
      %340 = vmatprep.subr.bf16.mxu0 0
      %341 = vmatpush2.bf16.msra.mxu0 0
      %342 = vmatprep.subr.bf16.mxu0 0
      %343 = vmatpush2.bf16.msra.mxu0 0
      %344 = vmatprep.subr.bf16.mxu0 0
      %345 = vmatpush2.bf16.msra.mxu0 0
      %346 = vmatprep.subr.bf16.mxu0 0
      %347 = vmatpush2.bf16.msra.mxu0 0
      %348 = vmatprep.subr.bf16.mxu0 0
      %349 = vmatpush2.bf16.msra.mxu0 0
      %350 = vmatprep.subr.bf16.mxu0 0
      %351 = vmatpush2.bf16.msra.mxu0 0
      %352 = vmatprep.mubr.bf16.mxu0 0
      %353 = vmatmul.mubr.bf16.gmra.mxu0 %v273
      %v354 = vpop.f32.mrf.mxu0
      %v355 = vadd.f32 %v258, %v354
      %v356 = vpop.f32.mrf.mxu0
      %v357 = vpop.f32.mrf.mxu0
      %v358 = vadd.f32 %v258, %v357
      %v359 = vpop.f32.mrf.mxu0
      %360 = vmatprep.mubr.bf16.mxu0 0
      %361 = vmatmul.mubr.bf16.gmra.mxu0 %v276
      %v362 = vpop.f32.mrf.mxu0
      %v363 = vadd.f32 %v258, %v362
      %v364 = vpop.f32.mrf.mxu0
      %v365 = vpop.f32.mrf.mxu0
      %v366 = vadd.f32 %v258, %v365
      %v367 = vpop.f32.mrf.mxu0
      %368 = vmatprep.mubr.bf16.mxu0 0
      %369 = vmatmul.mubr.bf16.gmra.mxu0 %v279
      %v370 = vpop.f32.mrf.mxu0
      %v371 = vadd.f32 %v258, %v370
      %v372 = vpop.f32.mrf.mxu0
      %v373 = vpop.f32.mrf.mxu0
      %v374 = vadd.f32 %v258, %v373
      %v375 = vpop.f32.mrf.mxu0
      %376 = vmatprep.mubr.bf16.mxu0 0
      %377 = vmatmul.mubr.bf16.gmra.mxu0 %v282
      %v378 = vpop.f32.mrf.mxu0
      %v379 = vadd.f32 %v258, %v378
      %v380 = vpop.f32.mrf.mxu0
      %v381 = vpop.f32.mrf.mxu0
      %v382 = vadd.f32 %v258, %v381
      %v383 = vpop.f32.mrf.mxu0
      %384 = vmatprep.mubr.bf16.mxu0 0
      %385 = vmatmul.mubr.bf16.gmra.mxu0 %v285
      %v386 = vpop.f32.mrf.mxu0
      %v387 = vadd.f32 %v258, %v386
      %v388 = vpop.f32.mrf.mxu0
      %v389 = vpop.f32.mrf.mxu0
      %v390 = vadd.f32 %v258, %v389
      %v391 = vpop.f32.mrf.mxu0
      %392 = vmatprep.mubr.bf16.mxu0 0
      %393 = vmatmul.mubr.bf16.gmra.mxu0 %v288
      %v394 = vpop.f32.mrf.mxu0
      %v395 = vadd.f32 %v258, %v394
      %v396 = vpop.f32.mrf.mxu0
      %v397 = vpop.f32.mrf.mxu0
      %v398 = vadd.f32 %v258, %v397
      %v399 = vpop.f32.mrf.mxu0
      %400 = vmatprep.mubr.bf16.mxu0 0
      %401 = vmatmul.mubr.bf16.gmra.mxu0 %v291
      %v402 = vpop.f32.mrf.mxu0
      %v403 = vadd.f32 %v258, %v402
      %v404 = vpop.f32.mrf.mxu0
      %v405 = vpop.f32.mrf.mxu0
      %v406 = vadd.f32 %v258, %v405
      %v407 = vpop.f32.mrf.mxu0
      %408 = vmatprep.mubr.bf16.mxu0 0
      %409 = vmatmul.mubr.bf16.gmra.mxu0 %v294
      %v410 = vpop.f32.mrf.mxu0
      %v411 = vadd.f32 %v258, %v410
      %v412 = vpop.f32.mrf.mxu0
      %v413 = vpop.f32.mrf.mxu0
      %v414 = vadd.f32 %v258, %v413
      %v415 = vpop.f32.mrf.mxu0
      %416 = vmatprep.mubr.bf16.mxu0 0
      %417 = vmatmul.mubr.bf16.gmra.mxu0 %v297
      %v418 = vpop.f32.mrf.mxu0
      %v419 = vadd.f32 %v258, %v418
      %v420 = vpop.f32.mrf.mxu0
      %v421 = vpop.f32.mrf.mxu0
      %v422 = vadd.f32 %v258, %v421
      %v423 = vpop.f32.mrf.mxu0
      %424 = vmatprep.mubr.bf16.mxu0 0
      %425 = vmatmul.mubr.bf16.gmra.mxu0 %v300
      %v426 = vpop.f32.mrf.mxu0
      %v427 = vadd.f32 %v258, %v426
      %v428 = vpop.f32.mrf.mxu0
      %v429 = vpop.f32.mrf.mxu0
      %v430 = vadd.f32 %v258, %v429
      %v431 = vpop.f32.mrf.mxu0
      %432 = vmatprep.mubr.bf16.mxu0 0
      %433 = vmatmul.mubr.bf16.gmra.mxu0 %v303
      %v434 = vpop.f32.mrf.mxu0
      %v435 = vadd.f32 %v258, %v434
      %v436 = vpop.f32.mrf.mxu0
      %v437 = vpop.f32.mrf.mxu0
      %v438 = vadd.f32 %v258, %v437
      %v439 = vpop.f32.mrf.mxu0
      %440 = vmatprep.mubr.bf16.mxu0 0
      %441 = vmatmul.mubr.bf16.gmra.mxu0 %v306
      %v442 = vpop.f32.mrf.mxu0
      %v443 = vadd.f32 %v258, %v442
      %v444 = vpop.f32.mrf.mxu0
      %v445 = vpop.f32.mrf.mxu0
      %v446 = vadd.f32 %v258, %v445
      %v447 = vpop.f32.mrf.mxu0
      %448 = vmatprep.mubr.bf16.mxu0 0
      %449 = vmatmul.mubr.bf16.gmra.mxu0 %v309
      %v450 = vpop.f32.mrf.mxu0
      %v451 = vadd.f32 %v258, %v450
      %v452 = vpop.f32.mrf.mxu0
      %v453 = vpop.f32.mrf.mxu0
      %v454 = vadd.f32 %v258, %v453
      %v455 = vpop.f32.mrf.mxu0
      %456 = vmatprep.mubr.bf16.mxu0 0
      %457 = vmatmul.mubr.bf16.gmra.mxu0 %v312
      %v458 = vpop.f32.mrf.mxu0
      %v459 = vadd.f32 %v258, %v458
      %v460 = vpop.f32.mrf.mxu0
      %v461 = vpop.f32.mrf.mxu0
      %v462 = vadd.f32 %v258, %v461
      %v463 = vpop.f32.mrf.mxu0
      %464 = vmatprep.mubr.bf16.mxu0 0
      %465 = vmatmul.mubr.bf16.gmra.mxu0 %v315
      %v466 = vpop.f32.mrf.mxu0
      %v467 = vadd.f32 %v258, %v466
      %v468 = vpop.f32.mrf.mxu0
      %v469 = vpop.f32.mrf.mxu0
      %v470 = vadd.f32 %v258, %v469
      %v471 = vpop.f32.mrf.mxu0
      %472 = vmatprep.mubr.bf16.mxu0 0
      %473 = vmatmul.mubr.bf16.gmra.mxu0 %v318
      %v474 = vpop.f32.mrf.mxu0
      %v475 = vadd.f32 %v258, %v474
      %v476 = vpop.f32.mrf.mxu0
      %v477 = vpop.f32.mrf.mxu0
      %v478 = vadd.f32 %v258, %v477
      %v479 = vpop.f32.mrf.mxu0
      %480 = vdwg.mxu0
      %v481 = vld [vmem:[%s3] sm:$0x1]
      %vm482 = vcmp.gt.f32.partialorder %v355, 0.0
      %vm483 = vcmp.gt.f32.partialorder %v358, 0.0
      %vm484 = vcmp.gt.f32.partialorder %v363, 0.0
      %vm485 = vcmp.gt.f32.partialorder %v366, 0.0
      %vm486 = vcmp.gt.f32.partialorder %v371, 0.0
      %vm487 = vcmp.gt.f32.partialorder %v374, 0.0
      %vm488 = vcmp.gt.f32.partialorder %v379, 0.0
      %vm489 = vcmp.gt.f32.partialorder %v382, 0.0
      %vm490 = vcmp.gt.f32.partialorder %v387, 0.0
      %vm491 = vcmp.gt.f32.partialorder %v390, 0.0
      %vm492 = vcmp.gt.f32.partialorder %v395, 0.0
      %vm493 = vcmp.gt.f32.partialorder %v398, 0.0
      %vm494 = vcmp.gt.f32.partialorder %v403, 0.0
      %vm495 = vcmp.gt.f32.partialorder %v406, 0.0
      %vm496 = vcmp.gt.f32.partialorder %v411, 0.0
      %vm497 = vcmp.gt.f32.partialorder %v414, 0.0
      %vm498 = vcmp.gt.f32.partialorder %v419, 0.0
      %vm499 = vcmp.gt.f32.partialorder %v422, 0.0
      %vm500 = vcmp.gt.f32.partialorder %v427, 0.0
      %vm501 = vcmp.gt.f32.partialorder %v430, 0.0
      %vm502 = vcmp.gt.f32.partialorder %v435, 0.0
      %vm503 = vcmp.gt.f32.partialorder %v438, 0.0
      %vm504 = vcmp.gt.f32.partialorder %v443, 0.0
      %vm505 = vcmp.gt.f32.partialorder %v446, 0.0
      %vm506 = vcmp.gt.f32.partialorder %v451, 0.0
      %vm507 = vcmp.gt.f32.partialorder %v454, 0.0
      %vm508 = vcmp.gt.f32.partialorder %v459, 0.0
      %vm509 = vcmp.gt.f32.partialorder %v462, 0.0
      %vm510 = vcmp.gt.f32.partialorder %v467, 0.0
      %vm511 = vcmp.gt.f32.partialorder %v470, 0.0
      %vm512 = vcmp.gt.f32.partialorder %v475, 0.0
      %vm513 = vcmp.gt.f32.partialorder %v478, 0.0
      %v514 = vlaneseq
      %v515 = vshrl.u32 %v514, 7
      %v516 = vsub.s32 0, %v515
      %v517 = vrot.slane %v481, %v516
      %v518 = vmul.f32 %v517, %v355
      %v519 = vmul.f32 %v517, %v358
      %v520 = vmul.f32 %v517, %v363
      %v521 = vmul.f32 %v517, %v366
      %v522 = vmul.f32 %v517, %v371
      %v523 = vmul.f32 %v517, %v374
      %v524 = vmul.f32 %v517, %v379
      %v525 = vmul.f32 %v517, %v382
      %v526 = vmul.f32 %v517, %v387
      %v527 = vmul.f32 %v517, %v390
      %v528 = vmul.f32 %v517, %v395
      %v529 = vmul.f32 %v517, %v398
      %v530 = vmul.f32 %v517, %v403
      %v531 = vmul.f32 %v517, %v406
      %v532 = vmul.f32 %v517, %v411
      %v533 = vmul.f32 %v517, %v414
      %v534 = vmul.f32 %v517, %v419
      %v535 = vmul.f32 %v517, %v422
      %v536 = vmul.f32 %v517, %v427
      %v537 = vmul.f32 %v517, %v430
      %v538 = vmul.f32 %v517, %v435
      %v539 = vmul.f32 %v517, %v438
      %v540 = vmul.f32 %v517, %v443
      %v541 = vmul.f32 %v517, %v446
      %v542 = vmul.f32 %v517, %v451
      %v543 = vmul.f32 %v517, %v454
      %v544 = vmul.f32 %v517, %v459
      %v545 = vmul.f32 %v517, %v462
      %v546 = vmul.f32 %v517, %v467
      %v547 = vmul.f32 %v517, %v470
      %v548 = vmul.f32 %v517, %v475
      %v549 = vmul.f32 %v517, %v478
      %v550 = vsel %vm482, %v355, %v518
      %v551 = vsel %vm483, %v358, %v519
      %v552 = vsel %vm484, %v363, %v520
      %v553 = vsel %vm485, %v366, %v521
      %v554 = vsel %vm486, %v371, %v522
      %v555 = vsel %vm487, %v374, %v523
      %v556 = vsel %vm488, %v379, %v524
      %v557 = vsel %vm489, %v382, %v525
      %v558 = vsel %vm490, %v387, %v526
      %v559 = vsel %vm491, %v390, %v527
      %v560 = vsel %vm492, %v395, %v528
      %v561 = vsel %vm493, %v398, %v529
      %v562 = vsel %vm494, %v403, %v530
      %v563 = vsel %vm495, %v406, %v531
      %v564 = vsel %vm496, %v411, %v532
      %v565 = vsel %vm497, %v414, %v533
      %v566 = vsel %vm498, %v419, %v534
      %v567 = vsel %vm499, %v422, %v535
      %v568 = vsel %vm500, %v427, %v536
      %v569 = vsel %vm501, %v430, %v537
      %v570 = vsel %vm502, %v435, %v538
      %v571 = vsel %vm503, %v438, %v539
      %v572 = vsel %vm504, %v443, %v540
      %v573 = vsel %vm505, %v446, %v541
      %v574 = vsel %vm506, %v451, %v542
      %v575 = vsel %vm507, %v454, %v543
      %v576 = vsel %vm508, %v459, %v544
      %v577 = vsel %vm509, %v462, %v545
      %v578 = vsel %vm510, %v467, %v546
      %v579 = vsel %vm511, %v470, %v547
      %v580 = vsel %vm512, %v475, %v548
      %v581 = vsel %vm513, %v478, %v549
      %v582 = vpack.c.bf16 %v551, %v550
      %v583 = vpack.c.bf16 %v553, %v552
      %v584 = vpack.c.bf16 %v555, %v554
      %v585 = vpack.c.bf16 %v557, %v556
      %v586 = vpack.c.bf16 %v559, %v558
      %v587 = vpack.c.bf16 %v561, %v560
      %v588 = vpack.c.bf16 %v563, %v562
      %v589 = vpack.c.bf16 %v565, %v564
      %v590 = vpack.c.bf16 %v567, %v566
      %v591 = vpack.c.bf16 %v569, %v568
      %v592 = vpack.c.bf16 %v571, %v570
      %v593 = vpack.c.bf16 %v573, %v572
      %v594 = vpack.c.bf16 %v575, %v574
      %v595 = vpack.c.bf16 %v577, %v576
      %v596 = vpack.c.bf16 %v579, %v578
      %v597 = vpack.c.bf16 %v581, %v580
      %s598 = scalar_lea.vmem %s1, 64
      %v599 = vld [vmem:[%s598] sm:$0xf]
      %v600 = vld [vmem:[%s598 + $0x4] sm:$0xf]
      %v601 = vld [vmem:[%s598 + $0x8] sm:$0xf]
      %v602 = vld [vmem:[%s598 + $0xc] sm:$0xf]
      %v603 = vld [vmem:[%s598 + $0x10] sm:$0xf]
      %v604 = vld [vmem:[%s598 + $0x14] sm:$0xf]
      %v605 = vld [vmem:[%s598 + $0x18] sm:$0xf]
      %v606 = vld [vmem:[%s598 + $0x1c] sm:$0xf]
      %v607 = vld [vmem:[%s598 + $0x20] sm:$0xf]
      %v608 = vld [vmem:[%s598 + $0x24] sm:$0xf]
      %v609 = vld [vmem:[%s598 + $0x28] sm:$0xf]
      %v610 = vld [vmem:[%s598 + $0x2c] sm:$0xf]
      %v611 = vld [vmem:[%s598 + $0x30] sm:$0xf]
      %v612 = vld [vmem:[%s598 + $0x34] sm:$0xf]
      %v613 = vld [vmem:[%s598 + $0x38] sm:$0xf]
      %v614 = vld [vmem:[%s598 + $0x3c] sm:$0xf]
      %v615 = vld [vmem:[%s2 + $0x1] sm:$0x1]
      %v616 = vlaneseq
      %v617 = vshrl.u32 %v616, 7
      %v618 = vsub.s32 0, %v617
      %v619 = vrot.slane %v615, %v618
      %v636 = vunpack.c.l.b16 %v599
      %v637 = vunpack.c.l.b16 %v600
      %v638 = vunpack.c.l.b16 %v601
      %v639 = vunpack.c.l.b16 %v602
      %v640 = vunpack.c.l.b16 %v603
      %v641 = vunpack.c.l.b16 %v604
      %v642 = vunpack.c.l.b16 %v605
      %v643 = vunpack.c.l.b16 %v606
      %v644 = vunpack.c.l.b16 %v607
      %v645 = vunpack.c.l.b16 %v608
      %v646 = vunpack.c.l.b16 %v609
      %v647 = vunpack.c.l.b16 %v610
      %v648 = vunpack.c.l.b16 %v611
      %v649 = vunpack.c.l.b16 %v612
      %v650 = vunpack.c.l.b16 %v613
      %v651 = vunpack.c.l.b16 %v614
      %v652 = vpack.c.b16 %v637, %v636
      %v653 = vpack.c.b16 %v639, %v638
      %v654 = vpack.c.b16 %v641, %v640
      %v655 = vpack.c.b16 %v643, %v642
      %v656 = vpack.c.b16 %v645, %v644
      %v657 = vpack.c.b16 %v647, %v646
      %v658 = vpack.c.b16 %v649, %v648
      %v659 = vpack.c.b16 %v651, %v650
      %668 = vmatprep.subr.bf16.mxu0 0
      %669 = vmatpush1.bf16.msra.mxu0 %v659
      %670 = vmatprep.subr.bf16.mxu0 0
      %671 = vmatpush1.bf16.msra.mxu0 %v658
      %672 = vmatprep.subr.bf16.mxu0 0
      %673 = vmatpush1.bf16.msra.mxu0 %v657
      %674 = vmatprep.subr.bf16.mxu0 0
      %675 = vmatpush1.bf16.msra.mxu0 %v656
      %676 = vmatprep.subr.bf16.mxu0 0
      %677 = vmatpush1.bf16.msra.mxu0 %v655
      %678 = vmatprep.subr.bf16.mxu0 0
      %679 = vmatpush1.bf16.msra.mxu0 %v654
      %680 = vmatprep.subr.bf16.mxu0 0
      %681 = vmatpush1.bf16.msra.mxu0 %v653
      %682 = vmatprep.subr.bf16.mxu0 0
      %683 = vmatpush1.bf16.msra.mxu0 %v652
      %684 = vmatprep.subr.bf16.mxu0 0
      %685 = vmatpush2.bf16.msra.mxu0 0
      %686 = vmatprep.subr.bf16.mxu0 0
      %687 = vmatpush2.bf16.msra.mxu0 0
      %688 = vmatprep.subr.bf16.mxu0 0
      %689 = vmatpush2.bf16.msra.mxu0 0
      %690 = vmatprep.subr.bf16.mxu0 0
      %691 = vmatpush2.bf16.msra.mxu0 0
      %692 = vmatprep.subr.bf16.mxu0 0
      %693 = vmatpush2.bf16.msra.mxu0 0
      %694 = vmatprep.subr.bf16.mxu0 0
      %695 = vmatpush2.bf16.msra.mxu0 0
      %696 = vmatprep.subr.bf16.mxu0 0
      %697 = vmatpush2.bf16.msra.mxu0 0
      %698 = vmatprep.subr.bf16.mxu0 0
      %699 = vmatpush2.bf16.msra.mxu0 0
      %700 = vmatprep.mubr.bf16.mxu0 0
      %701 = vmatmul.mubr.bf16.gmra.mxu0 %v582
      %v702 = vpop.f32.mrf.mxu0
      %v703 = vadd.f32 %v619, %v702
      %v704 = vpop.f32.mrf.mxu0
      %v705 = vpop.f32.mrf.mxu0
      %v706 = vadd.f32 %v619, %v705
      %v707 = vpop.f32.mrf.mxu0
      %708 = vmatprep.mubr.bf16.mxu0 0
      %709 = vmatmul.mubr.bf16.gmra.mxu0 %v583
      %v710 = vpop.f32.mrf.mxu0
      %v711 = vadd.f32 %v619, %v710
      %v712 = vpop.f32.mrf.mxu0
      %v713 = vpop.f32.mrf.mxu0
      %v714 = vadd.f32 %v619, %v713
      %v715 = vpop.f32.mrf.mxu0
      %716 = vmatprep.mubr.bf16.mxu0 0
      %717 = vmatmul.mubr.bf16.gmra.mxu0 %v584
      %v718 = vpop.f32.mrf.mxu0
      %v719 = vadd.f32 %v619, %v718
      %v720 = vpop.f32.mrf.mxu0
      %v721 = vpop.f32.mrf.mxu0
      %v722 = vadd.f32 %v619, %v721
      %v723 = vpop.f32.mrf.mxu0
      %724 = vmatprep.mubr.bf16.mxu0 0
      %725 = vmatmul.mubr.bf16.gmra.mxu0 %v585
      %v726 = vpop.f32.mrf.mxu0
      %v727 = vadd.f32 %v619, %v726
      %v728 = vpop.f32.mrf.mxu0
      %v729 = vpop.f32.mrf.mxu0
      %v730 = vadd.f32 %v619, %v729
      %v731 = vpop.f32.mrf.mxu0
      %732 = vmatprep.mubr.bf16.mxu0 0
      %733 = vmatmul.mubr.bf16.gmra.mxu0 %v586
      %v734 = vpop.f32.mrf.mxu0
      %v735 = vadd.f32 %v619, %v734
      %v736 = vpop.f32.mrf.mxu0
      %v737 = vpop.f32.mrf.mxu0
      %v738 = vadd.f32 %v619, %v737
      %v739 = vpop.f32.mrf.mxu0
      %740 = vmatprep.mubr.bf16.mxu0 0
      %741 = vmatmul.mubr.bf16.gmra.mxu0 %v587
      %v742 = vpop.f32.mrf.mxu0
      %v743 = vadd.f32 %v619, %v742
      %v744 = vpop.f32.mrf.mxu0
      %v745 = vpop.f32.mrf.mxu0
      %v746 = vadd.f32 %v619, %v745
      %v747 = vpop.f32.mrf.mxu0
      %748 = vmatprep.mubr.bf16.mxu0 0
      %749 = vmatmul.mubr.bf16.gmra.mxu0 %v588
      %v750 = vpop.f32.mrf.mxu0
      %v751 = vadd.f32 %v619, %v750
      %v752 = vpop.f32.mrf.mxu0
      %v753 = vpop.f32.mrf.mxu0
      %v754 = vadd.f32 %v619, %v753
      %v755 = vpop.f32.mrf.mxu0
      %756 = vmatprep.mubr.bf16.mxu0 0
      %757 = vmatmul.mubr.bf16.gmra.mxu0 %v589
      %v758 = vpop.f32.mrf.mxu0
      %v759 = vadd.f32 %v619, %v758
      %v760 = vpop.f32.mrf.mxu0
      %v761 = vpop.f32.mrf.mxu0
      %v762 = vadd.f32 %v619, %v761
      %v763 = vpop.f32.mrf.mxu0
      %764 = vmatprep.mubr.bf16.mxu0 0
      %765 = vmatmul.mubr.bf16.gmra.mxu0 %v590
      %v766 = vpop.f32.mrf.mxu0
      %v767 = vadd.f32 %v619, %v766
      %v768 = vpop.f32.mrf.mxu0
      %v769 = vpop.f32.mrf.mxu0
      %v770 = vadd.f32 %v619, %v769
      %v771 = vpop.f32.mrf.mxu0
      %772 = vmatprep.mubr.bf16.mxu0 0
      %773 = vmatmul.mubr.bf16.gmra.mxu0 %v591
      %v774 = vpop.f32.mrf.mxu0
      %v775 = vadd.f32 %v619, %v774
      %v776 = vpop.f32.mrf.mxu0
      %v777 = vpop.f32.mrf.mxu0
      %v778 = vadd.f32 %v619, %v777
      %v779 = vpop.f32.mrf.mxu0
      %780 = vmatprep.mubr.bf16.mxu0 0
      %781 = vmatmul.mubr.bf16.gmra.mxu0 %v592
      %v782 = vpop.f32.mrf.mxu0
      %v783 = vadd.f32 %v619, %v782
      %v784 = vpop.f32.mrf.mxu0
      %v785 = vpop.f32.mrf.mxu0
      %v786 = vadd.f32 %v619, %v785
      %v787 = vpop.f32.mrf.mxu0
      %788 = vmatprep.mubr.bf16.mxu0 0
      %789 = vmatmul.mubr.bf16.gmra.mxu0 %v593
      %v790 = vpop.f32.mrf.mxu0
      %v791 = vadd.f32 %v619, %v790
      %v792 = vpop.f32.mrf.mxu0
      %v793 = vpop.f32.mrf.mxu0
      %v794 = vadd.f32 %v619, %v793
      %v795 = vpop.f32.mrf.mxu0
      %796 = vmatprep.mubr.bf16.mxu0 0
      %797 = vmatmul.mubr.bf16.gmra.mxu0 %v594
      %v798 = vpop.f32.mrf.mxu0
      %v799 = vadd.f32 %v619, %v798
      %v800 = vpop.f32.mrf.mxu0
      %v801 = vpop.f32.mrf.mxu0
      %v802 = vadd.f32 %v619, %v801
      %v803 = vpop.f32.mrf.mxu0
      %804 = vmatprep.mubr.bf16.mxu0 0
      %805 = vmatmul.mubr.bf16.gmra.mxu0 %v595
      %v806 = vpop.f32.mrf.mxu0
      %v807 = vadd.f32 %v619, %v806
      %v808 = vpop.f32.mrf.mxu0
      %v809 = vpop.f32.mrf.mxu0
      %v810 = vadd.f32 %v619, %v809
      %v811 = vpop.f32.mrf.mxu0
      %812 = vmatprep.mubr.bf16.mxu0 0
      %813 = vmatmul.mubr.bf16.gmra.mxu0 %v596
      %v814 = vpop.f32.mrf.mxu0
      %v815 = vadd.f32 %v619, %v814
      %v816 = vpop.f32.mrf.mxu0
      %v817 = vpop.f32.mrf.mxu0
      %v818 = vadd.f32 %v619, %v817
      %v819 = vpop.f32.mrf.mxu0
      %820 = vmatprep.mubr.bf16.mxu0 0
      %821 = vmatmul.mubr.bf16.gmra.mxu0 %v597
      %v822 = vpop.f32.mrf.mxu0
      %v823 = vadd.f32 %v619, %v822
      %v824 = vpop.f32.mrf.mxu0
      %v825 = vpop.f32.mrf.mxu0
      %v826 = vadd.f32 %v619, %v825
      %v827 = vpop.f32.mrf.mxu0
      %828 = vdwg.mxu0
      %v829 = vld [vmem:[%s3 + $0x1] sm:$0x1]
      %vm830 = vcmp.gt.f32.partialorder %v703, 0.0
      %vm831 = vcmp.gt.f32.partialorder %v706, 0.0
      %vm832 = vcmp.gt.f32.partialorder %v711, 0.0
      %vm833 = vcmp.gt.f32.partialorder %v714, 0.0
      %vm834 = vcmp.gt.f32.partialorder %v719, 0.0
      %vm835 = vcmp.gt.f32.partialorder %v722, 0.0
      %vm836 = vcmp.gt.f32.partialorder %v727, 0.0
      %vm837 = vcmp.gt.f32.partialorder %v730, 0.0
      %vm838 = vcmp.gt.f32.partialorder %v735, 0.0
      %vm839 = vcmp.gt.f32.partialorder %v738, 0.0
      %vm840 = vcmp.gt.f32.partialorder %v743, 0.0
      %vm841 = vcmp.gt.f32.partialorder %v746, 0.0
      %vm842 = vcmp.gt.f32.partialorder %v751, 0.0
      %vm843 = vcmp.gt.f32.partialorder %v754, 0.0
      %vm844 = vcmp.gt.f32.partialorder %v759, 0.0
      %vm845 = vcmp.gt.f32.partialorder %v762, 0.0
      %vm846 = vcmp.gt.f32.partialorder %v767, 0.0
      %vm847 = vcmp.gt.f32.partialorder %v770, 0.0
      %vm848 = vcmp.gt.f32.partialorder %v775, 0.0
      %vm849 = vcmp.gt.f32.partialorder %v778, 0.0
      %vm850 = vcmp.gt.f32.partialorder %v783, 0.0
      %vm851 = vcmp.gt.f32.partialorder %v786, 0.0
      %vm852 = vcmp.gt.f32.partialorder %v791, 0.0
      %vm853 = vcmp.gt.f32.partialorder %v794, 0.0
      %vm854 = vcmp.gt.f32.partialorder %v799, 0.0
      %vm855 = vcmp.gt.f32.partialorder %v802, 0.0
      %vm856 = vcmp.gt.f32.partialorder %v807, 0.0
      %vm857 = vcmp.gt.f32.partialorder %v810, 0.0
      %vm858 = vcmp.gt.f32.partialorder %v815, 0.0
      %vm859 = vcmp.gt.f32.partialorder %v818, 0.0
      %vm860 = vcmp.gt.f32.partialorder %v823, 0.0
      %vm861 = vcmp.gt.f32.partialorder %v826, 0.0
      %v862 = vlaneseq
      %v863 = vshrl.u32 %v862, 7
      %v864 = vsub.s32 0, %v863
      %v865 = vrot.slane %v829, %v864
      %v866 = vmul.f32 %v865, %v703
      %v867 = vmul.f32 %v865, %v706
      %v868 = vmul.f32 %v865, %v711
      %v869 = vmul.f32 %v865, %v714
      %v870 = vmul.f32 %v865, %v719
      %v871 = vmul.f32 %v865, %v722
      %v872 = vmul.f32 %v865, %v727
      %v873 = vmul.f32 %v865, %v730
      %v874 = vmul.f32 %v865, %v735
      %v875 = vmul.f32 %v865, %v738
      %v876 = vmul.f32 %v865, %v743
      %v877 = vmul.f32 %v865, %v746
      %v878 = vmul.f32 %v865, %v751
      %v879 = vmul.f32 %v865, %v754
      %v880 = vmul.f32 %v865, %v759
      %v881 = vmul.f32 %v865, %v762
      %v882 = vmul.f32 %v865, %v767
      %v883 = vmul.f32 %v865, %v770
      %v884 = vmul.f32 %v865, %v775
      %v885 = vmul.f32 %v865, %v778
      %v886 = vmul.f32 %v865, %v783
      %v887 = vmul.f32 %v865, %v786
      %v888 = vmul.f32 %v865, %v791
      %v889 = vmul.f32 %v865, %v794
      %v890 = vmul.f32 %v865, %v799
      %v891 = vmul.f32 %v865, %v802
      %v892 = vmul.f32 %v865, %v807
      %v893 = vmul.f32 %v865, %v810
      %v894 = vmul.f32 %v865, %v815
      %v895 = vmul.f32 %v865, %v818
      %v896 = vmul.f32 %v865, %v823
      %v897 = vmul.f32 %v865, %v826
      %v898 = vsel %vm830, %v703, %v866
      %v899 = vsel %vm831, %v706, %v867
      %v900 = vsel %vm832, %v711, %v868
      %v901 = vsel %vm833, %v714, %v869
      %v902 = vsel %vm834, %v719, %v870
      %v903 = vsel %vm835, %v722, %v871
      %v904 = vsel %vm836, %v727, %v872
      %v905 = vsel %vm837, %v730, %v873
      %v906 = vsel %vm838, %v735, %v874
      %v907 = vsel %vm839, %v738, %v875
      %v908 = vsel %vm840, %v743, %v876
      %v909 = vsel %vm841, %v746, %v877
      %v910 = vsel %vm842, %v751, %v878
      %v911 = vsel %vm843, %v754, %v879
      %v912 = vsel %vm844, %v759, %v880
      %v913 = vsel %vm845, %v762, %v881
      %v914 = vsel %vm846, %v767, %v882
      %v915 = vsel %vm847, %v770, %v883
      %v916 = vsel %vm848, %v775, %v884
      %v917 = vsel %vm849, %v778, %v885
      %v918 = vsel %vm850, %v783, %v886
      %v919 = vsel %vm851, %v786, %v887
      %v920 = vsel %vm852, %v791, %v888
      %v921 = vsel %vm853, %v794, %v889
      %v922 = vsel %vm854, %v799, %v890
      %v923 = vsel %vm855, %v802, %v891
      %v924 = vsel %vm856, %v807, %v892
      %v925 = vsel %vm857, %v810, %v893
      %v926 = vsel %vm858, %v815, %v894
      %v927 = vsel %vm859, %v818, %v895
      %v928 = vsel %vm860, %v823, %v896
      %v929 = vsel %vm861, %v826, %v897
      %v930 = vpack.c.bf16 %v899, %v898
      %v931 = vpack.c.bf16 %v901, %v900
      %v932 = vpack.c.bf16 %v903, %v902
      %v933 = vpack.c.bf16 %v905, %v904
      %v934 = vpack.c.bf16 %v907, %v906
      %v935 = vpack.c.bf16 %v909, %v908
      %v936 = vpack.c.bf16 %v911, %v910
      %v937 = vpack.c.bf16 %v913, %v912
      %v938 = vpack.c.bf16 %v915, %v914
      %v939 = vpack.c.bf16 %v917, %v916
      %v940 = vpack.c.bf16 %v919, %v918
      %v941 = vpack.c.bf16 %v921, %v920
      %v942 = vpack.c.bf16 %v923, %v922
      %v943 = vpack.c.bf16 %v925, %v924
      %v944 = vpack.c.bf16 %v927, %v926
      %v945 = vpack.c.bf16 %v929, %v928
      %s946 = scalar_lea.vmem %s1, 128
      %v947 = vld [vmem:[%s946] sm:$0xf]
      %v948 = vld [vmem:[%s946 + $0x4] sm:$0xf]
      %v949 = vld [vmem:[%s946 + $0x8] sm:$0xf]
      %v950 = vld [vmem:[%s946 + $0xc] sm:$0xf]
      %v951 = vld [vmem:[%s946 + $0x10] sm:$0xf]
      %v952 = vld [vmem:[%s946 + $0x14] sm:$0xf]
      %v953 = vld [vmem:[%s946 + $0x18] sm:$0xf]
      %v954 = vld [vmem:[%s946 + $0x1c] sm:$0xf]
      %v955 = vld [vmem:[%s946 + $0x20] sm:$0xf]
      %v956 = vld [vmem:[%s946 + $0x24] sm:$0xf]
      %v957 = vld [vmem:[%s946 + $0x28] sm:$0xf]
      %v958 = vld [vmem:[%s946 + $0x2c] sm:$0xf]
      %v959 = vld [vmem:[%s946 + $0x30] sm:$0xf]
      %v960 = vld [vmem:[%s946 + $0x34] sm:$0xf]
      %v961 = vld [vmem:[%s946 + $0x38] sm:$0xf]
      %v962 = vld [vmem:[%s946 + $0x3c] sm:$0xf]
      %v963 = vld [vmem:[%s2 + $0x2] sm:$0x1]
      %v964 = vlaneseq
      %v965 = vshrl.u32 %v964, 7
      %v966 = vsub.s32 0, %v965
      %v967 = vrot.slane %v963, %v966
      %v984 = vunpack.c.l.b16 %v947
      %v985 = vunpack.c.l.b16 %v948
      %v986 = vunpack.c.l.b16 %v949
      %v987 = vunpack.c.l.b16 %v950
      %v988 = vunpack.c.l.b16 %v951
      %v989 = vunpack.c.l.b16 %v952
      %v990 = vunpack.c.l.b16 %v953
      %v991 = vunpack.c.l.b16 %v954
      %v992 = vunpack.c.l.b16 %v955
      %v993 = vunpack.c.l.b16 %v956
      %v994 = vunpack.c.l.b16 %v957
      %v995 = vunpack.c.l.b16 %v958
      %v996 = vunpack.c.l.b16 %v959
      %v997 = vunpack.c.l.b16 %v960
      %v998 = vunpack.c.l.b16 %v961
      %v999 = vunpack.c.l.b16 %v962
      %v1000 = vpack.c.b16 %v985, %v984
      %v1001 = vpack.c.b16 %v987, %v986
      %v1002 = vpack.c.b16 %v989, %v988
      %v1003 = vpack.c.b16 %v991, %v990
      %v1004 = vpack.c.b16 %v993, %v992
      %v1005 = vpack.c.b16 %v995, %v994
      %v1006 = vpack.c.b16 %v997, %v996
      %v1007 = vpack.c.b16 %v999, %v998
      %1016 = vmatprep.subr.bf16.mxu0 0
      %1017 = vmatpush1.bf16.msra.mxu0 %v1007
      %1018 = vmatprep.subr.bf16.mxu0 0
      %1019 = vmatpush1.bf16.msra.mxu0 %v1006
      %1020 = vmatprep.subr.bf16.mxu0 0
      %1021 = vmatpush1.bf16.msra.mxu0 %v1005
      %1022 = vmatprep.subr.bf16.mxu0 0
      %1023 = vmatpush1.bf16.msra.mxu0 %v1004
      %1024 = vmatprep.subr.bf16.mxu0 0
      %1025 = vmatpush1.bf16.msra.mxu0 %v1003
      %1026 = vmatprep.subr.bf16.mxu0 0
      %1027 = vmatpush1.bf16.msra.mxu0 %v1002
      %1028 = vmatprep.subr.bf16.mxu0 0
      %1029 = vmatpush1.bf16.msra.mxu0 %v1001
      %1030 = vmatprep.subr.bf16.mxu0 0
      %1031 = vmatpush1.bf16.msra.mxu0 %v1000
      %1032 = vmatprep.subr.bf16.mxu0 0
      %1033 = vmatpush2.bf16.msra.mxu0 0
      %1034 = vmatprep.subr.bf16.mxu0 0
      %1035 = vmatpush2.bf16.msra.mxu0 0
      %1036 = vmatprep.subr.bf16.mxu0 0
      %1037 = vmatpush2.bf16.msra.mxu0 0
      %1038 = vmatprep.subr.bf16.mxu0 0
      %1039 = vmatpush2.bf16.msra.mxu0 0
      %1040 = vmatprep.subr.bf16.mxu0 0
      %1041 = vmatpush2.bf16.msra.mxu0 0
      %1042 = vmatprep.subr.bf16.mxu0 0
      %1043 = vmatpush2.bf16.msra.mxu0 0
      %1044 = vmatprep.subr.bf16.mxu0 0
      %1045 = vmatpush2.bf16.msra.mxu0 0
      %1046 = vmatprep.subr.bf16.mxu0 0
      %1047 = vmatpush2.bf16.msra.mxu0 0
      %1048 = vmatprep.mubr.bf16.mxu0 0
      %1049 = vmatmul.mubr.bf16.gmra.mxu0 %v930
      %v1050 = vpop.f32.mrf.mxu0
      %v1051 = vadd.f32 %v967, %v1050
      %v1052 = vpop.f32.mrf.mxu0
      %v1053 = vpop.f32.mrf.mxu0
      %v1054 = vadd.f32 %v967, %v1053
      %v1055 = vpop.f32.mrf.mxu0
      %1056 = vmatprep.mubr.bf16.mxu0 0
      %1057 = vmatmul.mubr.bf16.gmra.mxu0 %v931
      %v1058 = vpop.f32.mrf.mxu0
      %v1059 = vadd.f32 %v967, %v1058
      %v1060 = vpop.f32.mrf.mxu0
      %v1061 = vpop.f32.mrf.mxu0
      %v1062 = vadd.f32 %v967, %v1061
      %v1063 = vpop.f32.mrf.mxu0
      %1064 = vmatprep.mubr.bf16.mxu0 0
      %1065 = vmatmul.mubr.bf16.gmra.mxu0 %v932
      %v1066 = vpop.f32.mrf.mxu0
      %v1067 = vadd.f32 %v967, %v1066
      %v1068 = vpop.f32.mrf.mxu0
      %v1069 = vpop.f32.mrf.mxu0
      %v1070 = vadd.f32 %v967, %v1069
      %v1071 = vpop.f32.mrf.mxu0
      %1072 = vmatprep.mubr.bf16.mxu0 0
      %1073 = vmatmul.mubr.bf16.gmra.mxu0 %v933
      %v1074 = vpop.f32.mrf.mxu0
      %v1075 = vadd.f32 %v967, %v1074
      %v1076 = vpop.f32.mrf.mxu0
      %v1077 = vpop.f32.mrf.mxu0
      %v1078 = vadd.f32 %v967, %v1077
      %v1079 = vpop.f32.mrf.mxu0
      %1080 = vmatprep.mubr.bf16.mxu0 0
      %1081 = vmatmul.mubr.bf16.gmra.mxu0 %v934
      %v1082 = vpop.f32.mrf.mxu0
      %v1083 = vadd.f32 %v967, %v1082
      %v1084 = vpop.f32.mrf.mxu0
      %v1085 = vpop.f32.mrf.mxu0
      %v1086 = vadd.f32 %v967, %v1085
      %v1087 = vpop.f32.mrf.mxu0
      %1088 = vmatprep.mubr.bf16.mxu0 0
      %1089 = vmatmul.mubr.bf16.gmra.mxu0 %v935
      %v1090 = vpop.f32.mrf.mxu0
      %v1091 = vadd.f32 %v967, %v1090
      %v1092 = vpop.f32.mrf.mxu0
      %v1093 = vpop.f32.mrf.mxu0
      %v1094 = vadd.f32 %v967, %v1093
      %v1095 = vpop.f32.mrf.mxu0
      %1096 = vmatprep.mubr.bf16.mxu0 0
      %1097 = vmatmul.mubr.bf16.gmra.mxu0 %v936
      %v1098 = vpop.f32.mrf.mxu0
      %v1099 = vadd.f32 %v967, %v1098
      %v1100 = vpop.f32.mrf.mxu0
      %v1101 = vpop.f32.mrf.mxu0
      %v1102 = vadd.f32 %v967, %v1101
      %v1103 = vpop.f32.mrf.mxu0
      %1104 = vmatprep.mubr.bf16.mxu0 0
      %1105 = vmatmul.mubr.bf16.gmra.mxu0 %v937
      %v1106 = vpop.f32.mrf.mxu0
      %v1107 = vadd.f32 %v967, %v1106
      %v1108 = vpop.f32.mrf.mxu0
      %v1109 = vpop.f32.mrf.mxu0
      %v1110 = vadd.f32 %v967, %v1109
      %v1111 = vpop.f32.mrf.mxu0
      %1112 = vmatprep.mubr.bf16.mxu0 0
      %1113 = vmatmul.mubr.bf16.gmra.mxu0 %v938
      %v1114 = vpop.f32.mrf.mxu0
      %v1115 = vadd.f32 %v967, %v1114
      %v1116 = vpop.f32.mrf.mxu0
      %v1117 = vpop.f32.mrf.mxu0
      %v1118 = vadd.f32 %v967, %v1117
      %v1119 = vpop.f32.mrf.mxu0
      %1120 = vmatprep.mubr.bf16.mxu0 0
      %1121 = vmatmul.mubr.bf16.gmra.mxu0 %v939
      %v1122 = vpop.f32.mrf.mxu0
      %v1123 = vadd.f32 %v967, %v1122
      %v1124 = vpop.f32.mrf.mxu0
      %v1125 = vpop.f32.mrf.mxu0
      %v1126 = vadd.f32 %v967, %v1125
      %v1127 = vpop.f32.mrf.mxu0
      %1128 = vmatprep.mubr.bf16.mxu0 0
      %1129 = vmatmul.mubr.bf16.gmra.mxu0 %v940
      %v1130 = vpop.f32.mrf.mxu0
      %v1131 = vadd.f32 %v967, %v1130
      %v1132 = vpop.f32.mrf.mxu0
      %v1133 = vpop.f32.mrf.mxu0
      %v1134 = vadd.f32 %v967, %v1133
      %v1135 = vpop.f32.mrf.mxu0
      %1136 = vmatprep.mubr.bf16.mxu0 0
      %1137 = vmatmul.mubr.bf16.gmra.mxu0 %v941
      %v1138 = vpop.f32.mrf.mxu0
      %v1139 = vadd.f32 %v967, %v1138
      %v1140 = vpop.f32.mrf.mxu0
      %v1141 = vpop.f32.mrf.mxu0
      %v1142 = vadd.f32 %v967, %v1141
      %v1143 = vpop.f32.mrf.mxu0
      %1144 = vmatprep.mubr.bf16.mxu0 0
      %1145 = vmatmul.mubr.bf16.gmra.mxu0 %v942
      %v1146 = vpop.f32.mrf.mxu0
      %v1147 = vadd.f32 %v967, %v1146
      %v1148 = vpop.f32.mrf.mxu0
      %v1149 = vpop.f32.mrf.mxu0
      %v1150 = vadd.f32 %v967, %v1149
      %v1151 = vpop.f32.mrf.mxu0
      %1152 = vmatprep.mubr.bf16.mxu0 0
      %1153 = vmatmul.mubr.bf16.gmra.mxu0 %v943
      %v1154 = vpop.f32.mrf.mxu0
      %v1155 = vadd.f32 %v967, %v1154
      %v1156 = vpop.f32.mrf.mxu0
      %v1157 = vpop.f32.mrf.mxu0
      %v1158 = vadd.f32 %v967, %v1157
      %v1159 = vpop.f32.mrf.mxu0
      %1160 = vmatprep.mubr.bf16.mxu0 0
      %1161 = vmatmul.mubr.bf16.gmra.mxu0 %v944
      %v1162 = vpop.f32.mrf.mxu0
      %v1163 = vadd.f32 %v967, %v1162
      %v1164 = vpop.f32.mrf.mxu0
      %v1165 = vpop.f32.mrf.mxu0
      %v1166 = vadd.f32 %v967, %v1165
      %v1167 = vpop.f32.mrf.mxu0
      %1168 = vmatprep.mubr.bf16.mxu0 0
      %1169 = vmatmul.mubr.bf16.gmra.mxu0 %v945
      %v1170 = vpop.f32.mrf.mxu0
      %v1171 = vadd.f32 %v967, %v1170
      %v1172 = vpop.f32.mrf.mxu0
      %v1173 = vpop.f32.mrf.mxu0
      %v1174 = vadd.f32 %v967, %v1173
      %v1175 = vpop.f32.mrf.mxu0
      %1176 = vdwg.mxu0
      %v1177 = vld [vmem:[%s3 + $0x2] sm:$0x1]
      %vm1178 = vcmp.gt.f32.partialorder %v1051, 0.0
      %vm1179 = vcmp.gt.f32.partialorder %v1054, 0.0
      %vm1180 = vcmp.gt.f32.partialorder %v1059, 0.0
      %vm1181 = vcmp.gt.f32.partialorder %v1062, 0.0
      %vm1182 = vcmp.gt.f32.partialorder %v1067, 0.0
      %vm1183 = vcmp.gt.f32.partialorder %v1070, 0.0
      %vm1184 = vcmp.gt.f32.partialorder %v1075, 0.0
      %vm1185 = vcmp.gt.f32.partialorder %v1078, 0.0
      %vm1186 = vcmp.gt.f32.partialorder %v1083, 0.0
      %vm1187 = vcmp.gt.f32.partialorder %v1086, 0.0
      %vm1188 = vcmp.gt.f32.partialorder %v1091, 0.0
      %vm1189 = vcmp.gt.f32.partialorder %v1094, 0.0
      %vm1190 = vcmp.gt.f32.partialorder %v1099, 0.0
      %vm1191 = vcmp.gt.f32.partialorder %v1102, 0.0
      %vm1192 = vcmp.gt.f32.partialorder %v1107, 0.0
      %vm1193 = vcmp.gt.f32.partialorder %v1110, 0.0
      %vm1194 = vcmp.gt.f32.partialorder %v1115, 0.0
      %vm1195 = vcmp.gt.f32.partialorder %v1118, 0.0
      %vm1196 = vcmp.gt.f32.partialorder %v1123, 0.0
      %vm1197 = vcmp.gt.f32.partialorder %v1126, 0.0
      %vm1198 = vcmp.gt.f32.partialorder %v1131, 0.0
      %vm1199 = vcmp.gt.f32.partialorder %v1134, 0.0
      %vm1200 = vcmp.gt.f32.partialorder %v1139, 0.0
      %vm1201 = vcmp.gt.f32.partialorder %v1142, 0.0
      %vm1202 = vcmp.gt.f32.partialorder %v1147, 0.0
      %vm1203 = vcmp.gt.f32.partialorder %v1150, 0.0
      %vm1204 = vcmp.gt.f32.partialorder %v1155, 0.0
      %vm1205 = vcmp.gt.f32.partialorder %v1158, 0.0
      %vm1206 = vcmp.gt.f32.partialorder %v1163, 0.0
      %vm1207 = vcmp.gt.f32.partialorder %v1166, 0.0
      %vm1208 = vcmp.gt.f32.partialorder %v1171, 0.0
      %vm1209 = vcmp.gt.f32.partialorder %v1174, 0.0
      %v1210 = vlaneseq
      %v1211 = vshrl.u32 %v1210, 7
      %v1212 = vsub.s32 0, %v1211
      %v1213 = vrot.slane %v1177, %v1212
      %v1214 = vmul.f32 %v1213, %v1051
      %v1215 = vmul.f32 %v1213, %v1054
      %v1216 = vmul.f32 %v1213, %v1059
      %v1217 = vmul.f32 %v1213, %v1062
      %v1218 = vmul.f32 %v1213, %v1067
      %v1219 = vmul.f32 %v1213, %v1070
      %v1220 = vmul.f32 %v1213, %v1075
      %v1221 = vmul.f32 %v1213, %v1078
      %v1222 = vmul.f32 %v1213, %v1083
      %v1223 = vmul.f32 %v1213, %v1086
      %v1224 = vmul.f32 %v1213, %v1091
      %v1225 = vmul.f32 %v1213, %v1094
      %v1226 = vmul.f32 %v1213, %v1099
      %v1227 = vmul.f32 %v1213, %v1102
      %v1228 = vmul.f32 %v1213, %v1107
      %v1229 = vmul.f32 %v1213, %v1110
      %v1230 = vmul.f32 %v1213, %v1115
      %v1231 = vmul.f32 %v1213, %v1118
      %v1232 = vmul.f32 %v1213, %v1123
      %v1233 = vmul.f32 %v1213, %v1126
      %v1234 = vmul.f32 %v1213, %v1131
      %v1235 = vmul.f32 %v1213, %v1134
      %v1236 = vmul.f32 %v1213, %v1139
      %v1237 = vmul.f32 %v1213, %v1142
      %v1238 = vmul.f32 %v1213, %v1147
      %v1239 = vmul.f32 %v1213, %v1150
      %v1240 = vmul.f32 %v1213, %v1155
      %v1241 = vmul.f32 %v1213, %v1158
      %v1242 = vmul.f32 %v1213, %v1163
      %v1243 = vmul.f32 %v1213, %v1166
      %v1244 = vmul.f32 %v1213, %v1171
      %v1245 = vmul.f32 %v1213, %v1174
      %v1246 = vsel %vm1178, %v1051, %v1214
      %v1247 = vsel %vm1179, %v1054, %v1215
      %v1248 = vsel %vm1180, %v1059, %v1216
      %v1249 = vsel %vm1181, %v1062, %v1217
      %v1250 = vsel %vm1182, %v1067, %v1218
      %v1251 = vsel %vm1183, %v1070, %v1219
      %v1252 = vsel %vm1184, %v1075, %v1220
      %v1253 = vsel %vm1185, %v1078, %v1221
      %v1254 = vsel %vm1186, %v1083, %v1222
      %v1255 = vsel %vm1187, %v1086, %v1223
      %v1256 = vsel %vm1188, %v1091, %v1224
      %v1257 = vsel %vm1189, %v1094, %v1225
      %v1258 = vsel %vm1190, %v1099, %v1226
      %v1259 = vsel %vm1191, %v1102, %v1227
      %v1260 = vsel %vm1192, %v1107, %v1228
      %v1261 = vsel %vm1193, %v1110, %v1229
      %v1262 = vsel %vm1194, %v1115, %v1230
      %v1263 = vsel %vm1195, %v1118, %v1231
      %v1264 = vsel %vm1196, %v1123, %v1232
      %v1265 = vsel %vm1197, %v1126, %v1233
      %v1266 = vsel %vm1198, %v1131, %v1234
      %v1267 = vsel %vm1199, %v1134, %v1235
      %v1268 = vsel %vm1200, %v1139, %v1236
      %v1269 = vsel %vm1201, %v1142, %v1237
      %v1270 = vsel %vm1202, %v1147, %v1238
      %v1271 = vsel %vm1203, %v1150, %v1239
      %v1272 = vsel %vm1204, %v1155, %v1240
      %v1273 = vsel %vm1205, %v1158, %v1241
      %v1274 = vsel %vm1206, %v1163, %v1242
      %v1275 = vsel %vm1207, %v1166, %v1243
      %v1276 = vsel %vm1208, %v1171, %v1244
      %v1277 = vsel %vm1209, %v1174, %v1245
      %v1278 = vpack.c.bf16 %v1247, %v1246
      %v1279 = vpack.c.bf16 %v1249, %v1248
      %v1280 = vpack.c.bf16 %v1251, %v1250
      %v1281 = vpack.c.bf16 %v1253, %v1252
      %v1282 = vpack.c.bf16 %v1255, %v1254
      %v1283 = vpack.c.bf16 %v1257, %v1256
      %v1284 = vpack.c.bf16 %v1259, %v1258
      %v1285 = vpack.c.bf16 %v1261, %v1260
      %v1286 = vpack.c.bf16 %v1263, %v1262
      %v1287 = vpack.c.bf16 %v1265, %v1264
      %v1288 = vpack.c.bf16 %v1267, %v1266
      %v1289 = vpack.c.bf16 %v1269, %v1268
      %v1290 = vpack.c.bf16 %v1271, %v1270
      %v1291 = vpack.c.bf16 %v1273, %v1272
      %v1292 = vpack.c.bf16 %v1275, %v1274
      %v1293 = vpack.c.bf16 %v1277, %v1276
      %s1294 = scalar_lea.vmem %s1, 192
      %v1295 = vld [vmem:[%s1294] sm:$0xf]
      %v1296 = vld [vmem:[%s1294 + $0x4] sm:$0xf]
      %v1297 = vld [vmem:[%s1294 + $0x8] sm:$0xf]
      %v1298 = vld [vmem:[%s1294 + $0xc] sm:$0xf]
      %v1299 = vld [vmem:[%s1294 + $0x10] sm:$0xf]
      %v1300 = vld [vmem:[%s1294 + $0x14] sm:$0xf]
      %v1301 = vld [vmem:[%s1294 + $0x18] sm:$0xf]
      %v1302 = vld [vmem:[%s1294 + $0x1c] sm:$0xf]
      %v1303 = vld [vmem:[%s1294 + $0x20] sm:$0xf]
      %v1304 = vld [vmem:[%s1294 + $0x24] sm:$0xf]
      %v1305 = vld [vmem:[%s1294 + $0x28] sm:$0xf]
      %v1306 = vld [vmem:[%s1294 + $0x2c] sm:$0xf]
      %v1307 = vld [vmem:[%s1294 + $0x30] sm:$0xf]
      %v1308 = vld [vmem:[%s1294 + $0x34] sm:$0xf]
      %v1309 = vld [vmem:[%s1294 + $0x38] sm:$0xf]
      %v1310 = vld [vmem:[%s1294 + $0x3c] sm:$0xf]
      %v1311 = vld [vmem:[%s2 + $0x3] sm:$0x1]
      %v1312 = vlaneseq
      %v1313 = vshrl.u32 %v1312, 7
      %v1314 = vsub.s32 0, %v1313
      %v1315 = vrot.slane %v1311, %v1314
      %v1332 = vunpack.c.l.b16 %v1295
      %v1333 = vunpack.c.l.b16 %v1296
      %v1334 = vunpack.c.l.b16 %v1297
      %v1335 = vunpack.c.l.b16 %v1298
      %v1336 = vunpack.c.l.b16 %v1299
      %v1337 = vunpack.c.l.b16 %v1300
      %v1338 = vunpack.c.l.b16 %v1301
      %v1339 = vunpack.c.l.b16 %v1302
      %v1340 = vunpack.c.l.b16 %v1303
      %v1341 = vunpack.c.l.b16 %v1304
      %v1342 = vunpack.c.l.b16 %v1305
      %v1343 = vunpack.c.l.b16 %v1306
      %v1344 = vunpack.c.l.b16 %v1307
      %v1345 = vunpack.c.l.b16 %v1308
      %v1346 = vunpack.c.l.b16 %v1309
      %v1347 = vunpack.c.l.b16 %v1310
      %v1348 = vpack.c.b16 %v1333, %v1332
      %v1349 = vpack.c.b16 %v1335, %v1334
      %v1350 = vpack.c.b16 %v1337, %v1336
      %v1351 = vpack.c.b16 %v1339, %v1338
      %v1352 = vpack.c.b16 %v1341, %v1340
      %v1353 = vpack.c.b16 %v1343, %v1342
      %v1354 = vpack.c.b16 %v1345, %v1344
      %v1355 = vpack.c.b16 %v1347, %v1346
      %1364 = vmatprep.subr.bf16.mxu0 0
      %1365 = vmatpush1.bf16.msra.mxu0 %v1355
      %1366 = vmatprep.subr.bf16.mxu0 0
      %1367 = vmatpush1.bf16.msra.mxu0 %v1354
      %1368 = vmatprep.subr.bf16.mxu0 0
      %1369 = vmatpush1.bf16.msra.mxu0 %v1353
      %1370 = vmatprep.subr.bf16.mxu0 0
      %1371 = vmatpush1.bf16.msra.mxu0 %v1352
      %1372 = vmatprep.subr.bf16.mxu0 0
      %1373 = vmatpush1.bf16.msra.mxu0 %v1351
      %1374 = vmatprep.subr.bf16.mxu0 0
      %1375 = vmatpush1.bf16.msra.mxu0 %v1350
      %1376 = vmatprep.subr.bf16.mxu0 0
      %1377 = vmatpush1.bf16.msra.mxu0 %v1349
      %1378 = vmatprep.subr.bf16.mxu0 0
      %1379 = vmatpush1.bf16.msra.mxu0 %v1348
      %1380 = vmatprep.subr.bf16.mxu0 0
      %1381 = vmatpush2.bf16.msra.mxu0 0
      %1382 = vmatprep.subr.bf16.mxu0 0
      %1383 = vmatpush2.bf16.msra.mxu0 0
      %1384 = vmatprep.subr.bf16.mxu0 0
      %1385 = vmatpush2.bf16.msra.mxu0 0
      %1386 = vmatprep.subr.bf16.mxu0 0
      %1387 = vmatpush2.bf16.msra.mxu0 0
      %1388 = vmatprep.subr.bf16.mxu0 0
      %1389 = vmatpush2.bf16.msra.mxu0 0
      %1390 = vmatprep.subr.bf16.mxu0 0
      %1391 = vmatpush2.bf16.msra.mxu0 0
      %1392 = vmatprep.subr.bf16.mxu0 0
      %1393 = vmatpush2.bf16.msra.mxu0 0
      %1394 = vmatprep.subr.bf16.mxu0 0
      %1395 = vmatpush2.bf16.msra.mxu0 0
      %1396 = vmatprep.mubr.bf16.mxu0 0
      %1397 = vmatmul.mubr.bf16.gmra.mxu0 %v1278
      %v1398 = vpop.f32.mrf.mxu0
      %v1399 = vadd.f32 %v1315, %v1398
      %v1400 = vpop.f32.mrf.mxu0
      %v1401 = vpop.f32.mrf.mxu0
      %v1402 = vadd.f32 %v1315, %v1401
      %v1403 = vpop.f32.mrf.mxu0
      %1404 = vmatprep.mubr.bf16.mxu0 0
      %1405 = vmatmul.mubr.bf16.gmra.mxu0 %v1279
      %v1406 = vpop.f32.mrf.mxu0
      %v1407 = vadd.f32 %v1315, %v1406
      %v1408 = vpop.f32.mrf.mxu0
      %v1409 = vpop.f32.mrf.mxu0
      %v1410 = vadd.f32 %v1315, %v1409
      %v1411 = vpop.f32.mrf.mxu0
      %1412 = vmatprep.mubr.bf16.mxu0 0
      %1413 = vmatmul.mubr.bf16.gmra.mxu0 %v1280
      %v1414 = vpop.f32.mrf.mxu0
      %v1415 = vadd.f32 %v1315, %v1414
      %v1416 = vpop.f32.mrf.mxu0
      %v1417 = vpop.f32.mrf.mxu0
      %v1418 = vadd.f32 %v1315, %v1417
      %v1419 = vpop.f32.mrf.mxu0
      %1420 = vmatprep.mubr.bf16.mxu0 0
      %1421 = vmatmul.mubr.bf16.gmra.mxu0 %v1281
      %v1422 = vpop.f32.mrf.mxu0
      %v1423 = vadd.f32 %v1315, %v1422
      %v1424 = vpop.f32.mrf.mxu0
      %v1425 = vpop.f32.mrf.mxu0
      %v1426 = vadd.f32 %v1315, %v1425
      %v1427 = vpop.f32.mrf.mxu0
      %1428 = vmatprep.mubr.bf16.mxu0 0
      %1429 = vmatmul.mubr.bf16.gmra.mxu0 %v1282
      %v1430 = vpop.f32.mrf.mxu0
      %v1431 = vadd.f32 %v1315, %v1430
      %v1432 = vpop.f32.mrf.mxu0
      %v1433 = vpop.f32.mrf.mxu0
      %v1434 = vadd.f32 %v1315, %v1433
      %v1435 = vpop.f32.mrf.mxu0
      %1436 = vmatprep.mubr.bf16.mxu0 0
      %1437 = vmatmul.mubr.bf16.gmra.mxu0 %v1283
      %v1438 = vpop.f32.mrf.mxu0
      %v1439 = vadd.f32 %v1315, %v1438
      %v1440 = vpop.f32.mrf.mxu0
      %v1441 = vpop.f32.mrf.mxu0
      %v1442 = vadd.f32 %v1315, %v1441
      %v1443 = vpop.f32.mrf.mxu0
      %1444 = vmatprep.mubr.bf16.mxu0 0
      %1445 = vmatmul.mubr.bf16.gmra.mxu0 %v1284
      %v1446 = vpop.f32.mrf.mxu0
      %v1447 = vadd.f32 %v1315, %v1446
      %v1448 = vpop.f32.mrf.mxu0
      %v1449 = vpop.f32.mrf.mxu0
      %v1450 = vadd.f32 %v1315, %v1449
      %v1451 = vpop.f32.mrf.mxu0
      %1452 = vmatprep.mubr.bf16.mxu0 0
      %1453 = vmatmul.mubr.bf16.gmra.mxu0 %v1285
      %v1454 = vpop.f32.mrf.mxu0
      %v1455 = vadd.f32 %v1315, %v1454
      %v1456 = vpop.f32.mrf.mxu0
      %v1457 = vpop.f32.mrf.mxu0
      %v1458 = vadd.f32 %v1315, %v1457
      %v1459 = vpop.f32.mrf.mxu0
      %1460 = vmatprep.mubr.bf16.mxu0 0
      %1461 = vmatmul.mubr.bf16.gmra.mxu0 %v1286
      %v1462 = vpop.f32.mrf.mxu0
      %v1463 = vadd.f32 %v1315, %v1462
      %v1464 = vpop.f32.mrf.mxu0
      %v1465 = vpop.f32.mrf.mxu0
      %v1466 = vadd.f32 %v1315, %v1465
      %v1467 = vpop.f32.mrf.mxu0
      %1468 = vmatprep.mubr.bf16.mxu0 0
      %1469 = vmatmul.mubr.bf16.gmra.mxu0 %v1287
      %v1470 = vpop.f32.mrf.mxu0
      %v1471 = vadd.f32 %v1315, %v1470
      %v1472 = vpop.f32.mrf.mxu0
      %v1473 = vpop.f32.mrf.mxu0
      %v1474 = vadd.f32 %v1315, %v1473
      %v1475 = vpop.f32.mrf.mxu0
      %1476 = vmatprep.mubr.bf16.mxu0 0
      %1477 = vmatmul.mubr.bf16.gmra.mxu0 %v1288
      %v1478 = vpop.f32.mrf.mxu0
      %v1479 = vadd.f32 %v1315, %v1478
      %v1480 = vpop.f32.mrf.mxu0
      %v1481 = vpop.f32.mrf.mxu0
      %v1482 = vadd.f32 %v1315, %v1481
      %v1483 = vpop.f32.mrf.mxu0
      %1484 = vmatprep.mubr.bf16.mxu0 0
      %1485 = vmatmul.mubr.bf16.gmra.mxu0 %v1289
      %v1486 = vpop.f32.mrf.mxu0
      %v1487 = vadd.f32 %v1315, %v1486
      %v1488 = vpop.f32.mrf.mxu0
      %v1489 = vpop.f32.mrf.mxu0
      %v1490 = vadd.f32 %v1315, %v1489
      %v1491 = vpop.f32.mrf.mxu0
      %1492 = vmatprep.mubr.bf16.mxu0 0
      %1493 = vmatmul.mubr.bf16.gmra.mxu0 %v1290
      %v1494 = vpop.f32.mrf.mxu0
      %v1495 = vadd.f32 %v1315, %v1494
      %v1496 = vpop.f32.mrf.mxu0
      %v1497 = vpop.f32.mrf.mxu0
      %v1498 = vadd.f32 %v1315, %v1497
      %v1499 = vpop.f32.mrf.mxu0
      %1500 = vmatprep.mubr.bf16.mxu0 0
      %1501 = vmatmul.mubr.bf16.gmra.mxu0 %v1291
      %v1502 = vpop.f32.mrf.mxu0
      %v1503 = vadd.f32 %v1315, %v1502
      %v1504 = vpop.f32.mrf.mxu0
      %v1505 = vpop.f32.mrf.mxu0
      %v1506 = vadd.f32 %v1315, %v1505
      %v1507 = vpop.f32.mrf.mxu0
      %1508 = vmatprep.mubr.bf16.mxu0 0
      %1509 = vmatmul.mubr.bf16.gmra.mxu0 %v1292
      %v1510 = vpop.f32.mrf.mxu0
      %v1511 = vadd.f32 %v1315, %v1510
      %v1512 = vpop.f32.mrf.mxu0
      %v1513 = vpop.f32.mrf.mxu0
      %v1514 = vadd.f32 %v1315, %v1513
      %v1515 = vpop.f32.mrf.mxu0
      %1516 = vmatprep.mubr.bf16.mxu0 0
      %1517 = vmatmul.mubr.bf16.gmra.mxu0 %v1293
      %v1518 = vpop.f32.mrf.mxu0
      %v1519 = vadd.f32 %v1315, %v1518
      %v1520 = vpop.f32.mrf.mxu0
      %v1521 = vpop.f32.mrf.mxu0
      %v1522 = vadd.f32 %v1315, %v1521
      %v1523 = vpop.f32.mrf.mxu0
      %1524 = vdwg.mxu0
      %v1525 = vld [vmem:[%s3 + $0x3] sm:$0x1]
      %vm1526 = vcmp.gt.f32.partialorder %v1399, 0.0
      %vm1527 = vcmp.gt.f32.partialorder %v1402, 0.0
      %vm1528 = vcmp.gt.f32.partialorder %v1407, 0.0
      %vm1529 = vcmp.gt.f32.partialorder %v1410, 0.0
      %vm1530 = vcmp.gt.f32.partialorder %v1415, 0.0
      %vm1531 = vcmp.gt.f32.partialorder %v1418, 0.0
      %vm1532 = vcmp.gt.f32.partialorder %v1423, 0.0
      %vm1533 = vcmp.gt.f32.partialorder %v1426, 0.0
      %vm1534 = vcmp.gt.f32.partialorder %v1431, 0.0
      %vm1535 = vcmp.gt.f32.partialorder %v1434, 0.0
      %vm1536 = vcmp.gt.f32.partialorder %v1439, 0.0
      %vm1537 = vcmp.gt.f32.partialorder %v1442, 0.0
      %vm1538 = vcmp.gt.f32.partialorder %v1447, 0.0
      %vm1539 = vcmp.gt.f32.partialorder %v1450, 0.0
      %vm1540 = vcmp.gt.f32.partialorder %v1455, 0.0
      %vm1541 = vcmp.gt.f32.partialorder %v1458, 0.0
      %vm1542 = vcmp.gt.f32.partialorder %v1463, 0.0
      %vm1543 = vcmp.gt.f32.partialorder %v1466, 0.0
      %vm1544 = vcmp.gt.f32.partialorder %v1471, 0.0
      %vm1545 = vcmp.gt.f32.partialorder %v1474, 0.0
      %vm1546 = vcmp.gt.f32.partialorder %v1479, 0.0
      %vm1547 = vcmp.gt.f32.partialorder %v1482, 0.0
      %vm1548 = vcmp.gt.f32.partialorder %v1487, 0.0
      %vm1549 = vcmp.gt.f32.partialorder %v1490, 0.0
      %vm1550 = vcmp.gt.f32.partialorder %v1495, 0.0
      %vm1551 = vcmp.gt.f32.partialorder %v1498, 0.0
      %vm1552 = vcmp.gt.f32.partialorder %v1503, 0.0
      %vm1553 = vcmp.gt.f32.partialorder %v1506, 0.0
      %vm1554 = vcmp.gt.f32.partialorder %v1511, 0.0
      %vm1555 = vcmp.gt.f32.partialorder %v1514, 0.0
      %vm1556 = vcmp.gt.f32.partialorder %v1519, 0.0
      %vm1557 = vcmp.gt.f32.partialorder %v1522, 0.0
      %v1558 = vlaneseq
      %v1559 = vshrl.u32 %v1558, 7
      %v1560 = vsub.s32 0, %v1559
      %v1561 = vrot.slane %v1525, %v1560
      %v1562 = vmul.f32 %v1561, %v1399
      %v1563 = vmul.f32 %v1561, %v1402
      %v1564 = vmul.f32 %v1561, %v1407
      %v1565 = vmul.f32 %v1561, %v1410
      %v1566 = vmul.f32 %v1561, %v1415
      %v1567 = vmul.f32 %v1561, %v1418
      %v1568 = vmul.f32 %v1561, %v1423
      %v1569 = vmul.f32 %v1561, %v1426
      %v1570 = vmul.f32 %v1561, %v1431
      %v1571 = vmul.f32 %v1561, %v1434
      %v1572 = vmul.f32 %v1561, %v1439
      %v1573 = vmul.f32 %v1561, %v1442
      %v1574 = vmul.f32 %v1561, %v1447
      %v1575 = vmul.f32 %v1561, %v1450
      %v1576 = vmul.f32 %v1561, %v1455
      %v1577 = vmul.f32 %v1561, %v1458
      %v1578 = vmul.f32 %v1561, %v1463
      %v1579 = vmul.f32 %v1561, %v1466
      %v1580 = vmul.f32 %v1561, %v1471
      %v1581 = vmul.f32 %v1561, %v1474
      %v1582 = vmul.f32 %v1561, %v1479
      %v1583 = vmul.f32 %v1561, %v1482
      %v1584 = vmul.f32 %v1561, %v1487
      %v1585 = vmul.f32 %v1561, %v1490
      %v1586 = vmul.f32 %v1561, %v1495
      %v1587 = vmul.f32 %v1561, %v1498
      %v1588 = vmul.f32 %v1561, %v1503
      %v1589 = vmul.f32 %v1561, %v1506
      %v1590 = vmul.f32 %v1561, %v1511
      %v1591 = vmul.f32 %v1561, %v1514
      %v1592 = vmul.f32 %v1561, %v1519
      %v1593 = vmul.f32 %v1561, %v1522
      %v1594 = vsel %vm1526, %v1399, %v1562
      %v1595 = vsel %vm1527, %v1402, %v1563
      %v1596 = vsel %vm1528, %v1407, %v1564
      %v1597 = vsel %vm1529, %v1410, %v1565
      %v1598 = vsel %vm1530, %v1415, %v1566
      %v1599 = vsel %vm1531, %v1418, %v1567
      %v1600 = vsel %vm1532, %v1423, %v1568
      %v1601 = vsel %vm1533, %v1426, %v1569
      %v1602 = vsel %vm1534, %v1431, %v1570
      %v1603 = vsel %vm1535, %v1434, %v1571
      %v1604 = vsel %vm1536, %v1439, %v1572
      %v1605 = vsel %vm1537, %v1442, %v1573
      %v1606 = vsel %vm1538, %v1447, %v1574
      %v1607 = vsel %vm1539, %v1450, %v1575
      %v1608 = vsel %vm1540, %v1455, %v1576
      %v1609 = vsel %vm1541, %v1458, %v1577
      %v1610 = vsel %vm1542, %v1463, %v1578
      %v1611 = vsel %vm1543, %v1466, %v1579
      %v1612 = vsel %vm1544, %v1471, %v1580
      %v1613 = vsel %vm1545, %v1474, %v1581
      %v1614 = vsel %vm1546, %v1479, %v1582
      %v1615 = vsel %vm1547, %v1482, %v1583
      %v1616 = vsel %vm1548, %v1487, %v1584
      %v1617 = vsel %vm1549, %v1490, %v1585
      %v1618 = vsel %vm1550, %v1495, %v1586
      %v1619 = vsel %vm1551, %v1498, %v1587
      %v1620 = vsel %vm1552, %v1503, %v1588
      %v1621 = vsel %vm1553, %v1506, %v1589
      %v1622 = vsel %vm1554, %v1511, %v1590
      %v1623 = vsel %vm1555, %v1514, %v1591
      %v1624 = vsel %vm1556, %v1519, %v1592
      %v1625 = vsel %vm1557, %v1522, %v1593
      %v1626 = vpack.c.bf16 %v1595, %v1594
      %v1627 = vpack.c.bf16 %v1597, %v1596
      %v1628 = vpack.c.bf16 %v1599, %v1598
      %v1629 = vpack.c.bf16 %v1601, %v1600
      %v1630 = vpack.c.bf16 %v1603, %v1602
      %v1631 = vpack.c.bf16 %v1605, %v1604
      %v1632 = vpack.c.bf16 %v1607, %v1606
      %v1633 = vpack.c.bf16 %v1609, %v1608
      %v1634 = vpack.c.bf16 %v1611, %v1610
      %v1635 = vpack.c.bf16 %v1613, %v1612
      %v1636 = vpack.c.bf16 %v1615, %v1614
      %v1637 = vpack.c.bf16 %v1617, %v1616
      %v1638 = vpack.c.bf16 %v1619, %v1618
      %v1639 = vpack.c.bf16 %v1621, %v1620
      %v1640 = vpack.c.bf16 %v1623, %v1622
      %v1641 = vpack.c.bf16 %v1625, %v1624
      %s1642 = scalar_lea.vmem %s1, 256
      %v1643 = vld [vmem:[%s1642] sm:$0xf]
      %v1644 = vld [vmem:[%s1642 + $0x4] sm:$0xf]
      %v1645 = vld [vmem:[%s1642 + $0x8] sm:$0xf]
      %v1646 = vld [vmem:[%s1642 + $0xc] sm:$0xf]
      %v1647 = vld [vmem:[%s1642 + $0x10] sm:$0xf]
      %v1648 = vld [vmem:[%s1642 + $0x14] sm:$0xf]
      %v1649 = vld [vmem:[%s1642 + $0x18] sm:$0xf]
      %v1650 = vld [vmem:[%s1642 + $0x1c] sm:$0xf]
      %v1651 = vld [vmem:[%s1642 + $0x20] sm:$0xf]
      %v1652 = vld [vmem:[%s1642 + $0x24] sm:$0xf]
      %v1653 = vld [vmem:[%s1642 + $0x28] sm:$0xf]
      %v1654 = vld [vmem:[%s1642 + $0x2c] sm:$0xf]
      %v1655 = vld [vmem:[%s1642 + $0x30] sm:$0xf]
      %v1656 = vld [vmem:[%s1642 + $0x34] sm:$0xf]
      %v1657 = vld [vmem:[%s1642 + $0x38] sm:$0xf]
      %v1658 = vld [vmem:[%s1642 + $0x3c] sm:$0xf]
      %v1659 = vld [vmem:[%s2 + $0x4] sm:$0x1]
      %v1660 = vlaneseq
      %v1661 = vshrl.u32 %v1660, 7
      %v1662 = vsub.s32 0, %v1661
      %v1663 = vrot.slane %v1659, %v1662
      %v1680 = vunpack.c.l.b16 %v1643
      %v1681 = vunpack.c.l.b16 %v1644
      %v1682 = vunpack.c.l.b16 %v1645
      %v1683 = vunpack.c.l.b16 %v1646
      %v1684 = vunpack.c.l.b16 %v1647
      %v1685 = vunpack.c.l.b16 %v1648
      %v1686 = vunpack.c.l.b16 %v1649
      %v1687 = vunpack.c.l.b16 %v1650
      %v1688 = vunpack.c.l.b16 %v1651
      %v1689 = vunpack.c.l.b16 %v1652
      %v1690 = vunpack.c.l.b16 %v1653
      %v1691 = vunpack.c.l.b16 %v1654
      %v1692 = vunpack.c.l.b16 %v1655
      %v1693 = vunpack.c.l.b16 %v1656
      %v1694 = vunpack.c.l.b16 %v1657
      %v1695 = vunpack.c.l.b16 %v1658
      %v1696 = vpack.c.b16 %v1681, %v1680
      %v1697 = vpack.c.b16 %v1683, %v1682
      %v1698 = vpack.c.b16 %v1685, %v1684
      %v1699 = vpack.c.b16 %v1687, %v1686
      %v1700 = vpack.c.b16 %v1689, %v1688
      %v1701 = vpack.c.b16 %v1691, %v1690
      %v1702 = vpack.c.b16 %v1693, %v1692
      %v1703 = vpack.c.b16 %v1695, %v1694
      %1712 = vmatprep.subr.bf16.mxu0 0
      %1713 = vmatpush1.bf16.msra.mxu0 %v1703
      %1714 = vmatprep.subr.bf16.mxu0 0
      %1715 = vmatpush1.bf16.msra.mxu0 %v1702
      %1716 = vmatprep.subr.bf16.mxu0 0
      %1717 = vmatpush1.bf16.msra.mxu0 %v1701
      %1718 = vmatprep.subr.bf16.mxu0 0
      %1719 = vmatpush1.bf16.msra.mxu0 %v1700
      %1720 = vmatprep.subr.bf16.mxu0 0
      %1721 = vmatpush1.bf16.msra.mxu0 %v1699
      %1722 = vmatprep.subr.bf16.mxu0 0
      %1723 = vmatpush1.bf16.msra.mxu0 %v1698
      %1724 = vmatprep.subr.bf16.mxu0 0
      %1725 = vmatpush1.bf16.msra.mxu0 %v1697
      %1726 = vmatprep.subr.bf16.mxu0 0
      %1727 = vmatpush1.bf16.msra.mxu0 %v1696
      %1728 = vmatprep.subr.bf16.mxu0 0
      %1729 = vmatpush2.bf16.msra.mxu0 0
      %1730 = vmatprep.subr.bf16.mxu0 0
      %1731 = vmatpush2.bf16.msra.mxu0 0
      %1732 = vmatprep.subr.bf16.mxu0 0
      %1733 = vmatpush2.bf16.msra.mxu0 0
      %1734 = vmatprep.subr.bf16.mxu0 0
      %1735 = vmatpush2.bf16.msra.mxu0 0
      %1736 = vmatprep.subr.bf16.mxu0 0
      %1737 = vmatpush2.bf16.msra.mxu0 0
      %1738 = vmatprep.subr.bf16.mxu0 0
      %1739 = vmatpush2.bf16.msra.mxu0 0
      %1740 = vmatprep.subr.bf16.mxu0 0
      %1741 = vmatpush2.bf16.msra.mxu0 0
      %1742 = vmatprep.subr.bf16.mxu0 0
      %1743 = vmatpush2.bf16.msra.mxu0 0
      %1744 = vmatprep.mubr.bf16.mxu0 0
      %1745 = vmatmul.mubr.bf16.gmra.mxu0 %v1626
      %v1746 = vpop.f32.mrf.mxu0
      %v1747 = vadd.f32 %v1663, %v1746
      %v1748 = vpop.f32.mrf.mxu0
      %v1749 = vpop.f32.mrf.mxu0
      %v1750 = vadd.f32 %v1663, %v1749
      %v1751 = vpop.f32.mrf.mxu0
      %1752 = vmatprep.mubr.bf16.mxu0 0
      %1753 = vmatmul.mubr.bf16.gmra.mxu0 %v1627
      %v1754 = vpop.f32.mrf.mxu0
      %v1755 = vadd.f32 %v1663, %v1754
      %v1756 = vpop.f32.mrf.mxu0
      %v1757 = vpop.f32.mrf.mxu0
      %v1758 = vadd.f32 %v1663, %v1757
      %v1759 = vpop.f32.mrf.mxu0
      %1760 = vmatprep.mubr.bf16.mxu0 0
      %1761 = vmatmul.mubr.bf16.gmra.mxu0 %v1628
      %v1762 = vpop.f32.mrf.mxu0
      %v1763 = vadd.f32 %v1663, %v1762
      %v1764 = vpop.f32.mrf.mxu0
      %v1765 = vpop.f32.mrf.mxu0
      %v1766 = vadd.f32 %v1663, %v1765
      %v1767 = vpop.f32.mrf.mxu0
      %1768 = vmatprep.mubr.bf16.mxu0 0
      %1769 = vmatmul.mubr.bf16.gmra.mxu0 %v1629
      %v1770 = vpop.f32.mrf.mxu0
      %v1771 = vadd.f32 %v1663, %v1770
      %v1772 = vpop.f32.mrf.mxu0
      %v1773 = vpop.f32.mrf.mxu0
      %v1774 = vadd.f32 %v1663, %v1773
      %v1775 = vpop.f32.mrf.mxu0
      %1776 = vmatprep.mubr.bf16.mxu0 0
      %1777 = vmatmul.mubr.bf16.gmra.mxu0 %v1630
      %v1778 = vpop.f32.mrf.mxu0
      %v1779 = vadd.f32 %v1663, %v1778
      %v1780 = vpop.f32.mrf.mxu0
      %v1781 = vpop.f32.mrf.mxu0
      %v1782 = vadd.f32 %v1663, %v1781
      %v1783 = vpop.f32.mrf.mxu0
      %1784 = vmatprep.mubr.bf16.mxu0 0
      %1785 = vmatmul.mubr.bf16.gmra.mxu0 %v1631
      %v1786 = vpop.f32.mrf.mxu0
      %v1787 = vadd.f32 %v1663, %v1786
      %v1788 = vpop.f32.mrf.mxu0
      %v1789 = vpop.f32.mrf.mxu0
      %v1790 = vadd.f32 %v1663, %v1789
      %v1791 = vpop.f32.mrf.mxu0
      %1792 = vmatprep.mubr.bf16.mxu0 0
      %1793 = vmatmul.mubr.bf16.gmra.mxu0 %v1632
      %v1794 = vpop.f32.mrf.mxu0
      %v1795 = vadd.f32 %v1663, %v1794
      %v1796 = vpop.f32.mrf.mxu0
      %v1797 = vpop.f32.mrf.mxu0
      %v1798 = vadd.f32 %v1663, %v1797
      %v1799 = vpop.f32.mrf.mxu0
      %1800 = vmatprep.mubr.bf16.mxu0 0
      %1801 = vmatmul.mubr.bf16.gmra.mxu0 %v1633
      %v1802 = vpop.f32.mrf.mxu0
      %v1803 = vadd.f32 %v1663, %v1802
      %v1804 = vpop.f32.mrf.mxu0
      %v1805 = vpop.f32.mrf.mxu0
      %v1806 = vadd.f32 %v1663, %v1805
      %v1807 = vpop.f32.mrf.mxu0
      %1808 = vmatprep.mubr.bf16.mxu0 0
      %1809 = vmatmul.mubr.bf16.gmra.mxu0 %v1634
      %v1810 = vpop.f32.mrf.mxu0
      %v1811 = vadd.f32 %v1663, %v1810
      %v1812 = vpop.f32.mrf.mxu0
      %v1813 = vpop.f32.mrf.mxu0
      %v1814 = vadd.f32 %v1663, %v1813
      %v1815 = vpop.f32.mrf.mxu0
      %1816 = vmatprep.mubr.bf16.mxu0 0
      %1817 = vmatmul.mubr.bf16.gmra.mxu0 %v1635
      %v1818 = vpop.f32.mrf.mxu0
      %v1819 = vadd.f32 %v1663, %v1818
      %v1820 = vpop.f32.mrf.mxu0
      %v1821 = vpop.f32.mrf.mxu0
      %v1822 = vadd.f32 %v1663, %v1821
      %v1823 = vpop.f32.mrf.mxu0
      %1824 = vmatprep.mubr.bf16.mxu0 0
      %1825 = vmatmul.mubr.bf16.gmra.mxu0 %v1636
      %v1826 = vpop.f32.mrf.mxu0
      %v1827 = vadd.f32 %v1663, %v1826
      %v1828 = vpop.f32.mrf.mxu0
      %v1829 = vpop.f32.mrf.mxu0
      %v1830 = vadd.f32 %v1663, %v1829
      %v1831 = vpop.f32.mrf.mxu0
      %1832 = vmatprep.mubr.bf16.mxu0 0
      %1833 = vmatmul.mubr.bf16.gmra.mxu0 %v1637
      %v1834 = vpop.f32.mrf.mxu0
      %v1835 = vadd.f32 %v1663, %v1834
      %v1836 = vpop.f32.mrf.mxu0
      %v1837 = vpop.f32.mrf.mxu0
      %v1838 = vadd.f32 %v1663, %v1837
      %v1839 = vpop.f32.mrf.mxu0
      %1840 = vmatprep.mubr.bf16.mxu0 0
      %1841 = vmatmul.mubr.bf16.gmra.mxu0 %v1638
      %v1842 = vpop.f32.mrf.mxu0
      %v1843 = vadd.f32 %v1663, %v1842
      %v1844 = vpop.f32.mrf.mxu0
      %v1845 = vpop.f32.mrf.mxu0
      %v1846 = vadd.f32 %v1663, %v1845
      %v1847 = vpop.f32.mrf.mxu0
      %1848 = vmatprep.mubr.bf16.mxu0 0
      %1849 = vmatmul.mubr.bf16.gmra.mxu0 %v1639
      %v1850 = vpop.f32.mrf.mxu0
      %v1851 = vadd.f32 %v1663, %v1850
      %v1852 = vpop.f32.mrf.mxu0
      %v1853 = vpop.f32.mrf.mxu0
      %v1854 = vadd.f32 %v1663, %v1853
      %v1855 = vpop.f32.mrf.mxu0
      %1856 = vmatprep.mubr.bf16.mxu0 0
      %1857 = vmatmul.mubr.bf16.gmra.mxu0 %v1640
      %v1858 = vpop.f32.mrf.mxu0
      %v1859 = vadd.f32 %v1663, %v1858
      %v1860 = vpop.f32.mrf.mxu0
      %v1861 = vpop.f32.mrf.mxu0
      %v1862 = vadd.f32 %v1663, %v1861
      %v1863 = vpop.f32.mrf.mxu0
      %1864 = vmatprep.mubr.bf16.mxu0 0
      %1865 = vmatmul.mubr.bf16.gmra.mxu0 %v1641
      %v1866 = vpop.f32.mrf.mxu0
      %v1867 = vadd.f32 %v1663, %v1866
      %v1868 = vpop.f32.mrf.mxu0
      %v1869 = vpop.f32.mrf.mxu0
      %v1870 = vadd.f32 %v1663, %v1869
      %v1871 = vpop.f32.mrf.mxu0
      %1872 = vdwg.mxu0
      %v1873 = vld [vmem:[%s3 + $0x4] sm:$0x1]
      %vm1874 = vcmp.gt.f32.partialorder %v1747, 0.0
      %vm1875 = vcmp.gt.f32.partialorder %v1750, 0.0
      %vm1876 = vcmp.gt.f32.partialorder %v1755, 0.0
      %vm1877 = vcmp.gt.f32.partialorder %v1758, 0.0
      %vm1878 = vcmp.gt.f32.partialorder %v1763, 0.0
      %vm1879 = vcmp.gt.f32.partialorder %v1766, 0.0
      %vm1880 = vcmp.gt.f32.partialorder %v1771, 0.0
      %vm1881 = vcmp.gt.f32.partialorder %v1774, 0.0
      %vm1882 = vcmp.gt.f32.partialorder %v1779, 0.0
      %vm1883 = vcmp.gt.f32.partialorder %v1782, 0.0
      %vm1884 = vcmp.gt.f32.partialorder %v1787, 0.0
      %vm1885 = vcmp.gt.f32.partialorder %v1790, 0.0
      %vm1886 = vcmp.gt.f32.partialorder %v1795, 0.0
      %vm1887 = vcmp.gt.f32.partialorder %v1798, 0.0
      %vm1888 = vcmp.gt.f32.partialorder %v1803, 0.0
      %vm1889 = vcmp.gt.f32.partialorder %v1806, 0.0
      %vm1890 = vcmp.gt.f32.partialorder %v1811, 0.0
      %vm1891 = vcmp.gt.f32.partialorder %v1814, 0.0
      %vm1892 = vcmp.gt.f32.partialorder %v1819, 0.0
      %vm1893 = vcmp.gt.f32.partialorder %v1822, 0.0
      %vm1894 = vcmp.gt.f32.partialorder %v1827, 0.0
      %vm1895 = vcmp.gt.f32.partialorder %v1830, 0.0
      %vm1896 = vcmp.gt.f32.partialorder %v1835, 0.0
      %vm1897 = vcmp.gt.f32.partialorder %v1838, 0.0
      %vm1898 = vcmp.gt.f32.partialorder %v1843, 0.0
      %vm1899 = vcmp.gt.f32.partialorder %v1846, 0.0
      %vm1900 = vcmp.gt.f32.partialorder %v1851, 0.0
      %vm1901 = vcmp.gt.f32.partialorder %v1854, 0.0
      %vm1902 = vcmp.gt.f32.partialorder %v1859, 0.0
      %vm1903 = vcmp.gt.f32.partialorder %v1862, 0.0
      %vm1904 = vcmp.gt.f32.partialorder %v1867, 0.0
      %vm1905 = vcmp.gt.f32.partialorder %v1870, 0.0
      %v1906 = vlaneseq
      %v1907 = vshrl.u32 %v1906, 7
      %v1908 = vsub.s32 0, %v1907
      %v1909 = vrot.slane %v1873, %v1908
      %v1910 = vmul.f32 %v1909, %v1747
      %v1911 = vmul.f32 %v1909, %v1750
      %v1912 = vmul.f32 %v1909, %v1755
      %v1913 = vmul.f32 %v1909, %v1758
      %v1914 = vmul.f32 %v1909, %v1763
      %v1915 = vmul.f32 %v1909, %v1766
      %v1916 = vmul.f32 %v1909, %v1771
      %v1917 = vmul.f32 %v1909, %v1774
      %v1918 = vmul.f32 %v1909, %v1779
      %v1919 = vmul.f32 %v1909, %v1782
      %v1920 = vmul.f32 %v1909, %v1787
      %v1921 = vmul.f32 %v1909, %v1790
      %v1922 = vmul.f32 %v1909, %v1795
      %v1923 = vmul.f32 %v1909, %v1798
      %v1924 = vmul.f32 %v1909, %v1803
      %v1925 = vmul.f32 %v1909, %v1806
      %v1926 = vmul.f32 %v1909, %v1811
      %v1927 = vmul.f32 %v1909, %v1814
      %v1928 = vmul.f32 %v1909, %v1819
      %v1929 = vmul.f32 %v1909, %v1822
      %v1930 = vmul.f32 %v1909, %v1827
      %v1931 = vmul.f32 %v1909, %v1830
      %v1932 = vmul.f32 %v1909, %v1835
      %v1933 = vmul.f32 %v1909, %v1838
      %v1934 = vmul.f32 %v1909, %v1843
      %v1935 = vmul.f32 %v1909, %v1846
      %v1936 = vmul.f32 %v1909, %v1851
      %v1937 = vmul.f32 %v1909, %v1854
      %v1938 = vmul.f32 %v1909, %v1859
      %v1939 = vmul.f32 %v1909, %v1862
      %v1940 = vmul.f32 %v1909, %v1867
      %v1941 = vmul.f32 %v1909, %v1870
      %v1942 = vsel %vm1874, %v1747, %v1910
      %v1943 = vsel %vm1875, %v1750, %v1911
      %v1944 = vsel %vm1876, %v1755, %v1912
      %v1945 = vsel %vm1877, %v1758, %v1913
      %v1946 = vsel %vm1878, %v1763, %v1914
      %v1947 = vsel %vm1879, %v1766, %v1915
      %v1948 = vsel %vm1880, %v1771, %v1916
      %v1949 = vsel %vm1881, %v1774, %v1917
      %v1950 = vsel %vm1882, %v1779, %v1918
      %v1951 = vsel %vm1883, %v1782, %v1919
      %v1952 = vsel %vm1884, %v1787, %v1920
      %v1953 = vsel %vm1885, %v1790, %v1921
      %v1954 = vsel %vm1886, %v1795, %v1922
      %v1955 = vsel %vm1887, %v1798, %v1923
      %v1956 = vsel %vm1888, %v1803, %v1924
      %v1957 = vsel %vm1889, %v1806, %v1925
      %v1958 = vsel %vm1890, %v1811, %v1926
      %v1959 = vsel %vm1891, %v1814, %v1927
      %v1960 = vsel %vm1892, %v1819, %v1928
      %v1961 = vsel %vm1893, %v1822, %v1929
      %v1962 = vsel %vm1894, %v1827, %v1930
      %v1963 = vsel %vm1895, %v1830, %v1931
      %v1964 = vsel %vm1896, %v1835, %v1932
      %v1965 = vsel %vm1897, %v1838, %v1933
      %v1966 = vsel %vm1898, %v1843, %v1934
      %v1967 = vsel %vm1899, %v1846, %v1935
      %v1968 = vsel %vm1900, %v1851, %v1936
      %v1969 = vsel %vm1901, %v1854, %v1937
      %v1970 = vsel %vm1902, %v1859, %v1938
      %v1971 = vsel %vm1903, %v1862, %v1939
      %v1972 = vsel %vm1904, %v1867, %v1940
      %v1973 = vsel %vm1905, %v1870, %v1941
      %1974 = vst.msk [vmem:[%s199] sm:$0xff] %vm271, %v1942
      %1975 = vst.msk [vmem:[%s199 + $0x8] sm:$0xff] %vm271, %v1943
      %1976 = vst.msk [vmem:[%s199 + $0x10] sm:$0xff] %vm271, %v1944
      %1977 = vst.msk [vmem:[%s199 + $0x18] sm:$0xff] %vm271, %v1945
      %1978 = vst.msk [vmem:[%s199 + $0x20] sm:$0xff] %vm271, %v1946
      %1979 = vst.msk [vmem:[%s199 + $0x28] sm:$0xff] %vm271, %v1947
      %1980 = vst.msk [vmem:[%s199 + $0x30] sm:$0xff] %vm271, %v1948
      %1981 = vst.msk [vmem:[%s199 + $0x38] sm:$0xff] %vm271, %v1949
      %1982 = vst.msk [vmem:[%s199 + $0x40] sm:$0xff] %vm271, %v1950
      %1983 = vst.msk [vmem:[%s199 + $0x48] sm:$0xff] %vm271, %v1951
      %1984 = vst.msk [vmem:[%s199 + $0x50] sm:$0xff] %vm271, %v1952
      %1985 = vst.msk [vmem:[%s199 + $0x58] sm:$0xff] %vm271, %v1953
      %1986 = vst.msk [vmem:[%s199 + $0x60] sm:$0xff] %vm271, %v1954
      %1987 = vst.msk [vmem:[%s199 + $0x68] sm:$0xff] %vm271, %v1955
      %1988 = vst.msk [vmem:[%s199 + $0x70] sm:$0xff] %vm271, %v1956
      %1989 = vst.msk [vmem:[%s199 + $0x78] sm:$0xff] %vm271, %v1957
      %1990 = vst.msk [vmem:[%s199 + $0x80] sm:$0xff] %vm271, %v1958
      %1991 = vst.msk [vmem:[%s199 + $0x88] sm:$0xff] %vm271, %v1959
      %1992 = vst.msk [vmem:[%s199 + $0x90] sm:$0xff] %vm271, %v1960
      %1993 = vst.msk [vmem:[%s199 + $0x98] sm:$0xff] %vm271, %v1961
      %1994 = vst.msk [vmem:[%s199 + $0xa0] sm:$0xff] %vm271, %v1962
      %1995 = vst.msk [vmem:[%s199 + $0xa8] sm:$0xff] %vm271, %v1963
      %1996 = vst.msk [vmem:[%s199 + $0xb0] sm:$0xff] %vm271, %v1964
      %1997 = vst.msk [vmem:[%s199 + $0xb8] sm:$0xff] %vm271, %v1965
      %1998 = vst.msk [vmem:[%s199 + $0xc0] sm:$0xff] %vm271, %v1966
      %1999 = vst.msk [vmem:[%s199 + $0xc8] sm:$0xff] %vm271, %v1967
      %2000 = vst.msk [vmem:[%s199 + $0xd0] sm:$0xff] %vm271, %v1968
      %2001 = vst.msk [vmem:[%s199 + $0xd8] sm:$0xff] %vm271, %v1969
      %2002 = vst.msk [vmem:[%s199 + $0xe0] sm:$0xff] %vm271, %v1970
      %2003 = vst.msk [vmem:[%s199 + $0xe8] sm:$0xff] %vm271, %v1971
      %2004 = vst.msk [vmem:[%s199 + $0xf0] sm:$0xff] %vm271, %v1972
      %2005 = vst.msk [vmem:[%s199 + $0xf8] sm:$0xff] %vm271, %v1973
      %s2006 = smul.u32 32, %s15
      %p2007 = scmp.lt.s32.totalorder %s2006, 63
      %s2008 = scalar_select %p2007, %s2006, 63
      %s2009 = smul.addr %s2008, 8
      %s2010 = scalar_lea.vmem %s4, %s2009
      // Predicated region
      $region37: #{encoder_forward.1} parent=35 // pred_check
        %p2011 = pneg %p122
      $region38: #{encoder_forward.1} parent=35 // pred_check_branch
        %2013 = sbr.rel (%p2011) target = $region40
      $region39: #{encoder_forward.1} parent=35 // pred_region
        %s2014 = smul.u32 32, %s15
      $region40: #{encoder_forward.1} parent=35 // pred_fallthru
        _
    $region36: #{encoder_forward.1} parent=5 // pred_fallthru
      _
    %p2015 = scmp.le.s32.totalorder 2, %s10
    // Predicated region
    $region41: #{encoder_forward.1} parent=5 // pred_check
      %p2016 = pneg %p2015
    $region42: #{encoder_forward.1} parent=5 // pred_check_branch
      %2018 = sbr.rel (%p2016) target = $region44
    $region43: #{encoder_forward.1} parent=5 // pred_region
      %s2019 = ssub.s32 %s10, 2
      // Predicated region
      $region45: #{encoder_forward.1} parent=43 // pred_check
        %p2020 = pneg %p128
      $region46: #{encoder_forward.1} parent=43 // pred_check_branch
        %2022 = sbr.rel (%p2020) target = $region48
      $region47: #{encoder_forward.1} parent=43 // pred_region
        %s2023 = smul.u32 32, %s16
        %p2024 = scmp.lt.s32.totalorder %s2023, 63
        %s2025 = scalar_select %p2024, %s2023, 63
        %s2026 = smul.addr %s2025, 8
        %s2027 = scalar_lea.vmem %s4, %s2026
      $region48: #{encoder_forward.1} parent=43 // pred_fallthru
        _
    $region44: #{encoder_forward.1} parent=5 // pred_fallthru
      _
  $region6: #{encoder_forward.1} parent=0 // loop_footer
    %s14 = sadd.s32 1, %s10
  $region7: #{encoder_forward.1} parent=0 // loop_footer_branch
    %9 = sbr.rel target = $region3
  $region8: #{encoder_forward.1} parent=0 // loop_exit
    _

</llo_original>
